<compile_context>
chip_gen: v5e
topology: v5e:2x2
jax: 0.10.0
libtpu: 0.0.40
codegen_flags: <defaults>
</compile_context>

<pallas_src>
import jax
import jax.numpy as jnp
from jax import lax
from jax.experimental import pallas as pl
from jax.experimental.pallas import tpu as pltpu

KERNEL_SIZES = (5, 9, 13)  # odd, ascending -> cascade of radius-2 pools


def _neg_fill(dtype):
    if jnp.issubdtype(dtype, jnp.floating):
        return jnp.array(-jnp.inf, dtype=dtype)
    return jnp.array(jnp.iinfo(dtype).min, dtype=dtype)


def _shift(x, d, axis, neg):
    """Shape-preserving shift: y[..., i, ...] = x[..., i+d, ...]; out-of-range -> neg."""
    if d == 0:
        return x
    size = x.shape[axis]
    a = abs(d)
    if a >= size:
        return jnp.full(x.shape, neg, x.dtype)
    fill_shape = list(x.shape)
    fill_shape[axis] = a
    fill = jnp.full(tuple(fill_shape), neg, x.dtype)
    if d > 0:
        body = lax.slice_in_dim(x, a, size, axis=axis)
        return jnp.concatenate([body, fill], axis=axis)
    body = lax.slice_in_dim(x, 0, size - a, axis=axis)
    return jnp.concatenate([fill, body], axis=axis)


def _window_max(x, pad, axis, neg):
    """Sliding-window max of radius `pad` along `axis` (values outside bounds = neg)."""
    out = x
    for d in range(1, pad + 1):
        out = jnp.maximum(out, _shift(x, d, axis, neg))
        out = jnp.maximum(out, _shift(x, -d, axis, neg))
    return out


def _spp_kernel(x_ref, o_ref):
    # x_ref: (1, H, W, Cb)             channel-last block, channels on the lane axis
    # o_ref: (1, n_branch, H, W, Cb)   pooled branches (5, 9, 13) + identity
    x = x_ref[0]
    neg = _neg_fill(x.dtype)
    n_k = len(KERNEL_SIZES)

    # Identity branch first: its store overlaps the pooling compute.
    o_ref[0, n_k] = x

    # Cascaded separable pools: pool_k = pool_inc ∘ pool_prev with inc = k - prev + 1.
    p = x
    prev_k = 1
    for i, k in enumerate(KERNEL_SIZES):
        pad = (k - prev_k) // 2
        p = _window_max(p, pad, axis=0, neg=neg)  # H: untiled axis, shifts are free
        p = _window_max(p, pad, axis=1, neg=neg)  # W: sublane axis only, lanes untouched
        o_ref[0, i] = p
        prev_k = k


def _vmem_capacity_bytes():
    try:
        info = pltpu.get_tpu_info()
        cap = getattr(info, "vmem_capacity_bytes", None)
        if cap:
            return int(cap)
    except Exception:
        pass
    return 64 << 20  # conservative default (v7x per-core VMEM)


def _pick_channel_block(C, H, W, itemsize, budget_bytes):
    """Largest Cb that is a multiple of 128, divides C, and fits the per-block budget."""
    if C % 128 != 0:
        return C  # small / irregular channel counts: take the full channel dim
    best = 128
    cb = 128
    while cb <= C:
        if C % cb == 0 and H * W * cb * itemsize <= budget_bytes:
            best = cb
        cb += 128
    return best


def spp_pallas(x):
    """x: (N, C, H, W) array (NCHW like PyTorch). Returns (N, 4*C, H, W)."""
    N, C, H, W = x.shape
    n_branch = len(KERNEL_SIZES) + 1
    itemsize = jnp.dtype(x.dtype).itemsize

    vmem_cap = _vmem_capacity_bytes()
    # double-buffered input + 4x double-buffered output + in-kernel temporaries
    # ~= 14x the input block; keep headroom -> cap the input block at ~1/20 of VMEM.
    block_budget = vmem_cap // 20
    vmem_limit = min((vmem_cap * 3) // 4, 96 << 20)

    cb = _pick_channel_block(C, H, W, itemsize, block_budget)
    assert C % cb == 0
    grid = (N, C // cb)

    # Channel-last so C sits on the 128-lane axis inside the kernel.
    x_nhwc = jnp.transpose(x, (0, 2, 3, 1))  # (N, H, W, C)

    out = pl.pallas_call(
        _spp_kernel,
        out_shape=jax.ShapeDtypeStruct((N, n_branch, H, W, C), x.dtype),
        grid=grid,
        in_specs=[pl.BlockSpec((1, H, W, cb), lambda n, c: (n, 0, 0, c))],
        out_specs=pl.BlockSpec((1, n_branch, H, W, cb),
                               lambda n, c: (n, 0, 0, 0, c)),
        compiler_params=pltpu.CompilerParams(
            dimension_semantics=("parallel", "parallel"),
            vmem_limit_bytes=vmem_limit),
    )(x_nhwc)

    # (N, 4, H, W, C) -> (N, 4, C, H, W) -> (N, 4*C, H, W): matches torch.cat order.
    return jnp.transpose(out, (0, 1, 4, 2, 3)).reshape(N, n_branch * C, H, W)


def spp_reference(x):
    """Pure-JAX reference mirroring the PyTorch max-pool cluster + concat."""
    outs = []
    for k in KERNEL_SIZES:
        p = k // 2
        outs.append(
            lax.reduce_window(
                x, -jnp.inf, lax.max,
                window_dimensions=(1, 1, k, k),
                window_strides=(1, 1, 1, 1),
                padding=((0, 0), (0, 0), (p, p), (p, p)),
            )
        )
    outs.append(x)
    return jnp.concatenate(outs, axis=1)


if __name__ == "__main__":
    key = jax.random.PRNGKey(0)

    # Small NCHW test (module's native layout).
    x1 = jax.random.normal(key, (2, 4, 16, 16), dtype=jnp.float32)
    out1 = jax.block_until_ready(spp_pallas(x1))
    ref1 = spp_reference(x1)
    assert out1.shape == (2, 16, 16, 16), out1.shape
    assert jnp.allclose(out1, ref1), "Pallas SPP mismatch vs reference (small)"

    # Lane-dense path: C multiple of 128, SPP-like 13x13 spatial.
    x2 = jax.random.normal(jax.random.PRNGKey(0), (1, 128, 13, 13), dtype=jnp.float32)
    out2 = jax.block_until_ready(spp_pallas(x2))
    ref2 = spp_reference(x2)
    assert out2.shape == (1, 512, 13, 13), out2.shape
    assert jnp.allclose(out2, ref2), "Pallas SPP mismatch vs reference (lane-dense)"

    print("KERNEL_OK")
</pallas_src>

<mosaic_0001>
module attributes {stable_mosaic.version = 11 : i64} {
  func.func @_spp_kernel(%arg0: i32, %arg1: i32, %arg2: memref<1x16x16x4xf32, #tpu.memory_space<vmem>>, %arg3: memref<1x4x16x16x4xf32, #tpu.memory_space<vmem>>) attributes {dimension_semantics = [#tpu.dimension_semantics<parallel>, #tpu.dimension_semantics<parallel>], iteration_bounds = array<i64: 2, 1>, scalar_prefetch = 0 : i64, scratch_operands = 0 : i64, tpu.core_type = #tpu.core_type<tc>, window_params = [{transform_indices = @transform_0, window_bounds = array<i64: 1, 16, 16, 4>}, {transform_indices = @transform_1, window_bounds = array<i64: 1, 4, 16, 16, 4>}]} {
    %c0 = arith.constant 0 : index
    %c0_0 = arith.constant 0 : index
    %c0_1 = arith.constant 0 : index
    %c0_2 = arith.constant 0 : index
    %0 = vector.load %arg2[%c0, %c0_0, %c0_1, %c0_2] : memref<1x16x16x4xf32, #tpu.memory_space<vmem>>, vector<1x16x16x4xf32>
    %1 = vector.shape_cast %0 : vector<1x16x16x4xf32> to vector<16x16x4xf32>
    %c0_3 = arith.constant 0 : index
    %c3 = arith.constant 3 : index
    %c0_4 = arith.constant 0 : index
    %c0_5 = arith.constant 0 : index
    %c0_6 = arith.constant 0 : index
    %2 = vector.load %arg3[%c0_3, %c3, %c0_4, %c0_5, %c0_6] : memref<1x4x16x16x4xf32, #tpu.memory_space<vmem>>, vector<1x1x16x16x4xf32>
    %3 = vector.shape_cast %2 : vector<1x1x16x16x4xf32> to vector<16x16x4xf32>
    %4 = vector.shape_cast %1 : vector<16x16x4xf32> to vector<1x1x16x16x4xf32>
    tpu.vector_store %arg3[%c0_3, %c3, %c0_4, %c0_5, %c0_6], %4 {strides = array<i32>} : memref<1x4x16x16x4xf32, #tpu.memory_space<vmem>>, vector<1x1x16x16x4xf32>,
    %cst = arith.constant 0xFF800000 : f32
    %5 = vector.broadcast %cst : f32 to vector<1x16x4xf32>
    %6 = vector.extract_strided_slice %1 {offsets = [1, 0, 0], sizes = [15, 16, 4], strides = [1, 1, 1]} : vector<16x16x4xf32> to vector<15x16x4xf32>
    %7 = tpu.concatenate %6, %5 in 0 : vector<15x16x4xf32>, vector<1x16x4xf32> -> vector<16x16x4xf32>
    %8 = arith.maximumf %1, %7 : vector<16x16x4xf32>
    %cst_7 = arith.constant 0xFF800000 : f32
    %9 = vector.broadcast %cst_7 : f32 to vector<1x16x4xf32>
    %10 = vector.extract_strided_slice %1 {offsets = [0, 0, 0], sizes = [15, 16, 4], strides = [1, 1, 1]} : vector<16x16x4xf32> to vector<15x16x4xf32>
    %11 = tpu.concatenate %9, %10 in 0 : vector<1x16x4xf32>, vector<15x16x4xf32> -> vector<16x16x4xf32>
    %12 = arith.maximumf %8, %11 : vector<16x16x4xf32>
    %cst_8 = arith.constant 0xFF800000 : f32
    %13 = vector.broadcast %cst_8 : f32 to vector<2x16x4xf32>
    %14 = vector.extract_strided_slice %1 {offsets = [2, 0, 0], sizes = [14, 16, 4], strides = [1, 1, 1]} : vector<16x16x4xf32> to vector<14x16x4xf32>
    %15 = tpu.concatenate %14, %13 in 0 : vector<14x16x4xf32>, vector<2x16x4xf32> -> vector<16x16x4xf32>
    %16 = arith.maximumf %12, %15 : vector<16x16x4xf32>
    %cst_9 = arith.constant 0xFF800000 : f32
    %17 = vector.broadcast %cst_9 : f32 to vector<2x16x4xf32>
    %18 = vector.extract_strided_slice %1 {offsets = [0, 0, 0], sizes = [14, 16, 4], strides = [1, 1, 1]} : vector<16x16x4xf32> to vector<14x16x4xf32>
    %19 = tpu.concatenate %17, %18 in 0 : vector<2x16x4xf32>, vector<14x16x4xf32> -> vector<16x16x4xf32>
    %20 = arith.maximumf %16, %19 : vector<16x16x4xf32>
    %cst_10 = arith.constant 0xFF800000 : f32
    %21 = vector.broadcast %cst_10 : f32 to vector<16x1x4xf32>
    %22 = vector.extract_strided_slice %20 {offsets = [0, 1, 0], sizes = [16, 15, 4], strides = [1, 1, 1]} : vector<16x16x4xf32> to vector<16x15x4xf32>
    %23 = tpu.concatenate %22, %21 in 1 : vector<16x15x4xf32>, vector<16x1x4xf32> -> vector<16x16x4xf32>
    %24 = arith.maximumf %20, %23 : vector<16x16x4xf32>
    %cst_11 = arith.constant 0xFF800000 : f32
    %25 = vector.broadcast %cst_11 : f32 to vector<16x1x4xf32>
    %26 = vector.extract_strided_slice %20 {offsets = [0, 0, 0], sizes = [16, 15, 4], strides = [1, 1, 1]} : vector<16x16x4xf32> to vector<16x15x4xf32>
    %27 = tpu.concatenate %25, %26 in 1 : vector<16x1x4xf32>, vector<16x15x4xf32> -> vector<16x16x4xf32>
    %28 = arith.maximumf %24, %27 : vector<16x16x4xf32>
    %cst_12 = arith.constant 0xFF800000 : f32
    %29 = vector.broadcast %cst_12 : f32 to vector<16x2x4xf32>
    %30 = vector.extract_strided_slice %20 {offsets = [0, 2, 0], sizes = [16, 14, 4], strides = [1, 1, 1]} : vector<16x16x4xf32> to vector<16x14x4xf32>
    %31 = tpu.concatenate %30, %29 in 1 : vector<16x14x4xf32>, vector<16x2x4xf32> -> vector<16x16x4xf32>
    %32 = arith.maximumf %28, %31 : vector<16x16x4xf32>
    %cst_13 = arith.constant 0xFF800000 : f32
    %33 = vector.broadcast %cst_13 : f32 to vector<16x2x4xf32>
    %34 = vector.extract_strided_slice %20 {offsets = [0, 0, 0], sizes = [16, 14, 4], strides = [1, 1, 1]} : vector<16x16x4xf32> to vector<16x14x4xf32>
    %35 = tpu.concatenate %33, %34 in 1 : vector<16x2x4xf32>, vector<16x14x4xf32> -> vector<16x16x4xf32>
    %36 = arith.maximumf %32, %35 : vector<16x16x4xf32>
    %c0_14 = arith.constant 0 : index
    %c0_15 = arith.constant 0 : index
    %c0_16 = arith.constant 0 : index
    %c0_17 = arith.constant 0 : index
    %c0_18 = arith.constant 0 : index
    %37 = vector.load %arg3[%c0_14, %c0_15, %c0_16, %c0_17, %c0_18] : memref<1x4x16x16x4xf32, #tpu.memory_space<vmem>>, vector<1x1x16x16x4xf32>
    %38 = vector.shape_cast %37 : vector<1x1x16x16x4xf32> to vector<16x16x4xf32>
    %39 = vector.shape_cast %36 : vector<16x16x4xf32> to vector<1x1x16x16x4xf32>
    tpu.vector_store %arg3[%c0_14, %c0_15, %c0_16, %c0_17, %c0_18], %39 {strides = array<i32>} : memref<1x4x16x16x4xf32, #tpu.memory_space<vmem>>, vector<1x1x16x16x4xf32>,
    %cst_19 = arith.constant 0xFF800000 : f32
    %40 = vector.broadcast %cst_19 : f32 to vector<1x16x4xf32>
    %41 = vector.extract_strided_slice %36 {offsets = [1, 0, 0], sizes = [15, 16, 4], strides = [1, 1, 1]} : vector<16x16x4xf32> to vector<15x16x4xf32>
    %42 = tpu.concatenate %41, %40 in 0 : vector<15x16x4xf32>, vector<1x16x4xf32> -> vector<16x16x4xf32>
    %43 = arith.maximumf %36, %42 : vector<16x16x4xf32>
    %cst_20 = arith.constant 0xFF800000 : f32
    %44 = vector.broadcast %cst_20 : f32 to vector<1x16x4xf32>
    %45 = vector.extract_strided_slice %36 {offsets = [0, 0, 0], sizes = [15, 16, 4], strides = [1, 1, 1]} : vector<16x16x4xf32> to vector<15x16x4xf32>
    %46 = tpu.concatenate %44, %45 in 0 : vector<1x16x4xf32>, vector<15x16x4xf32> -> vector<16x16x4xf32>
    %47 = arith.maximumf %43, %46 : vector<16x16x4xf32>
    %cst_21 = arith.constant 0xFF800000 : f32
    %48 = vector.broadcast %cst_21 : f32 to vector<2x16x4xf32>
    %49 = vector.extract_strided_slice %36 {offsets = [2, 0, 0], sizes = [14, 16, 4], strides = [1, 1, 1]} : vector<16x16x4xf32> to vector<14x16x4xf32>
    %50 = tpu.concatenate %49, %48 in 0 : vector<14x16x4xf32>, vector<2x16x4xf32> -> vector<16x16x4xf32>
    %51 = arith.maximumf %47, %50 : vector<16x16x4xf32>
    %cst_22 = arith.constant 0xFF800000 : f32
    %52 = vector.broadcast %cst_22 : f32 to vector<2x16x4xf32>
    %53 = vector.extract_strided_slice %36 {offsets = [0, 0, 0], sizes = [14, 16, 4], strides = [1, 1, 1]} : vector<16x16x4xf32> to vector<14x16x4xf32>
    %54 = tpu.concatenate %52, %53 in 0 : vector<2x16x4xf32>, vector<14x16x4xf32> -> vector<16x16x4xf32>
    %55 = arith.maximumf %51, %54 : vector<16x16x4xf32>
    %cst_23 = arith.constant 0xFF800000 : f32
    %56 = vector.broadcast %cst_23 : f32 to vector<16x1x4xf32>
    %57 = vector.extract_strided_slice %55 {offsets = [0, 1, 0], sizes = [16, 15, 4], strides = [1, 1, 1]} : vector<16x16x4xf32> to vector<16x15x4xf32>
    %58 = tpu.concatenate %57, %56 in 1 : vector<16x15x4xf32>, vector<16x1x4xf32> -> vector<16x16x4xf32>
    %59 = arith.maximumf %55, %58 : vector<16x16x4xf32>
    %cst_24 = arith.constant 0xFF800000 : f32
    %60 = vector.broadcast %cst_24 : f32 to vector<16x1x4xf32>
    %61 = vector.extract_strided_slice %55 {offsets = [0, 0, 0], sizes = [16, 15, 4], strides = [1, 1, 1]} : vector<16x16x4xf32> to vector<16x15x4xf32>
    %62 = tpu.concatenate %60, %61 in 1 : vector<16x1x4xf32>, vector<16x15x4xf32> -> vector<16x16x4xf32>
    %63 = arith.maximumf %59, %62 : vector<16x16x4xf32>
    %cst_25 = arith.constant 0xFF800000 : f32
    %64 = vector.broadcast %cst_25 : f32 to vector<16x2x4xf32>
    %65 = vector.extract_strided_slice %55 {offsets = [0, 2, 0], sizes = [16, 14, 4], strides = [1, 1, 1]} : vector<16x16x4xf32> to vector<16x14x4xf32>
    %66 = tpu.concatenate %65, %64 in 1 : vector<16x14x4xf32>, vector<16x2x4xf32> -> vector<16x16x4xf32>
    %67 = arith.maximumf %63, %66 : vector<16x16x4xf32>
    %cst_26 = arith.constant 0xFF800000 : f32
    %68 = vector.broadcast %cst_26 : f32 to vector<16x2x4xf32>
    %69 = vector.extract_strided_slice %55 {offsets = [0, 0, 0], sizes = [16, 14, 4], strides = [1, 1, 1]} : vector<16x16x4xf32> to vector<16x14x4xf32>
    %70 = tpu.concatenate %68, %69 in 1 : vector<16x2x4xf32>, vector<16x14x4xf32> -> vector<16x16x4xf32>
    %71 = arith.maximumf %67, %70 : vector<16x16x4xf32>
    %c0_27 = arith.constant 0 : index
    %c1 = arith.constant 1 : index
    %c0_28 = arith.constant 0 : index
    %c0_29 = arith.constant 0 : index
    %c0_30 = arith.constant 0 : index
    %72 = vector.load %arg3[%c0_27, %c1, %c0_28, %c0_29, %c0_30] : memref<1x4x16x16x4xf32, #tpu.memory_space<vmem>>, vector<1x1x16x16x4xf32>
    %73 = vector.shape_cast %72 : vector<1x1x16x16x4xf32> to vector<16x16x4xf32>
    %74 = vector.shape_cast %71 : vector<16x16x4xf32> to vector<1x1x16x16x4xf32>
    tpu.vector_store %arg3[%c0_27, %c1, %c0_28, %c0_29, %c0_30], %74 {strides = array<i32>} : memref<1x4x16x16x4xf32, #tpu.memory_space<vmem>>, vector<1x1x16x16x4xf32>,
    %cst_31 = arith.constant 0xFF800000 : f32
    %75 = vector.broadcast %cst_31 : f32 to vector<1x16x4xf32>
    %76 = vector.extract_strided_slice %71 {offsets = [1, 0, 0], sizes = [15, 16, 4], strides = [1, 1, 1]} : vector<16x16x4xf32> to vector<15x16x4xf32>
    %77 = tpu.concatenate %76, %75 in 0 : vector<15x16x4xf32>, vector<1x16x4xf32> -> vector<16x16x4xf32>
    %78 = arith.maximumf %71, %77 : vector<16x16x4xf32>
    %cst_32 = arith.constant 0xFF800000 : f32
    %79 = vector.broadcast %cst_32 : f32 to vector<1x16x4xf32>
    %80 = vector.extract_strided_slice %71 {offsets = [0, 0, 0], sizes = [15, 16, 4], strides = [1, 1, 1]} : vector<16x16x4xf32> to vector<15x16x4xf32>
    %81 = tpu.concatenate %79, %80 in 0 : vector<1x16x4xf32>, vector<15x16x4xf32> -> vector<16x16x4xf32>
    %82 = arith.maximumf %78, %81 : vector<16x16x4xf32>
    %cst_33 = arith.constant 0xFF800000 : f32
    %83 = vector.broadcast %cst_33 : f32 to vector<2x16x4xf32>
    %84 = vector.extract_strided_slice %71 {offsets = [2, 0, 0], sizes = [14, 16, 4], strides = [1, 1, 1]} : vector<16x16x4xf32> to vector<14x16x4xf32>
    %85 = tpu.concatenate %84, %83 in 0 : vector<14x16x4xf32>, vector<2x16x4xf32> -> vector<16x16x4xf32>
    %86 = arith.maximumf %82, %85 : vector<16x16x4xf32>
    %cst_34 = arith.constant 0xFF800000 : f32
    %87 = vector.broadcast %cst_34 : f32 to vector<2x16x4xf32>
    %88 = vector.extract_strided_slice %71 {offsets = [0, 0, 0], sizes = [14, 16, 4], strides = [1, 1, 1]} : vector<16x16x4xf32> to vector<14x16x4xf32>
    %89 = tpu.concatenate %87, %88 in 0 : vector<2x16x4xf32>, vector<14x16x4xf32> -> vector<16x16x4xf32>
    %90 = arith.maximumf %86, %89 : vector<16x16x4xf32>
    %cst_35 = arith.constant 0xFF800000 : f32
    %91 = vector.broadcast %cst_35 : f32 to vector<16x1x4xf32>
    %92 = vector.extract_strided_slice %90 {offsets = [0, 1, 0], sizes = [16, 15, 4], strides = [1, 1, 1]} : vector<16x16x4xf32> to vector<16x15x4xf32>
    %93 = tpu.concatenate %92, %91 in 1 : vector<16x15x4xf32>, vector<16x1x4xf32> -> vector<16x16x4xf32>
    %94 = arith.maximumf %90, %93 : vector<16x16x4xf32>
    %cst_36 = arith.constant 0xFF800000 : f32
    %95 = vector.broadcast %cst_36 : f32 to vector<16x1x4xf32>
    %96 = vector.extract_strided_slice %90 {offsets = [0, 0, 0], sizes = [16, 15, 4], strides = [1, 1, 1]} : vector<16x16x4xf32> to vector<16x15x4xf32>
    %97 = tpu.concatenate %95, %96 in 1 : vector<16x1x4xf32>, vector<16x15x4xf32> -> vector<16x16x4xf32>
    %98 = arith.maximumf %94, %97 : vector<16x16x4xf32>
    %cst_37 = arith.constant 0xFF800000 : f32
    %99 = vector.broadcast %cst_37 : f32 to vector<16x2x4xf32>
    %100 = vector.extract_strided_slice %90 {offsets = [0, 2, 0], sizes = [16, 14, 4], strides = [1, 1, 1]} : vector<16x16x4xf32> to vector<16x14x4xf32>
    %101 = tpu.concatenate %100, %99 in 1 : vector<16x14x4xf32>, vector<16x2x4xf32> -> vector<16x16x4xf32>
    %102 = arith.maximumf %98, %101 : vector<16x16x4xf32>
    %cst_38 = arith.constant 0xFF800000 : f32
    %103 = vector.broadcast %cst_38 : f32 to vector<16x2x4xf32>
    %104 = vector.extract_strided_slice %90 {offsets = [0, 0, 0], sizes = [16, 14, 4], strides = [1, 1, 1]} : vector<16x16x4xf32> to vector<16x14x4xf32>
    %105 = tpu.concatenate %103, %104 in 1 : vector<16x2x4xf32>, vector<16x14x4xf32> -> vector<16x16x4xf32>
    %106 = arith.maximumf %102, %105 : vector<16x16x4xf32>
    %c0_39 = arith.constant 0 : index
    %c2 = arith.constant 2 : index
    %c0_40 = arith.constant 0 : index
    %c0_41 = arith.constant 0 : index
    %c0_42 = arith.constant 0 : index
    %107 = vector.load %arg3[%c0_39, %c2, %c0_40, %c0_41, %c0_42] : memref<1x4x16x16x4xf32, #tpu.memory_space<vmem>>, vector<1x1x16x16x4xf32>
    %108 = vector.shape_cast %107 : vector<1x1x16x16x4xf32> to vector<16x16x4xf32>
    %109 = vector.shape_cast %106 : vector<16x16x4xf32> to vector<1x1x16x16x4xf32>
    tpu.vector_store %arg3[%c0_39, %c2, %c0_40, %c0_41, %c0_42], %109 {strides = array<i32>} : memref<1x4x16x16x4xf32, #tpu.memory_space<vmem>>, vector<1x1x16x16x4xf32>,
    return
  }
  func.func @transform_0(%arg0: i32, %arg1: i32) -> (i32, i32, i32, i32) {
    %c0_i32 = arith.constant 0 : i32
    %c0_i32_0 = arith.constant 0 : i32
    %c0_i32_1 = arith.constant 0 : i32
    return %arg0, %c0_i32, %c0_i32_0, %arg1 : i32, i32, i32, i32
  }
  func.func @transform_1(%arg0: i32, %arg1: i32) -> (i32, i32, i32, i32, i32) {
    %c0_i32 = arith.constant 0 : i32
    %c0_i32_0 = arith.constant 0 : i32
    %c0_i32_1 = arith.constant 0 : i32
    %c0_i32_2 = arith.constant 0 : i32
    return %arg0, %c0_i32, %c0_i32_0, %c0_i32_1, %arg1 : i32, i32, i32, i32, i32
  }
}

</mosaic_0001>

<llo_original>
// kernel: tpu_custom_call.1
$region0: #{tpu_custom_call.1}
  #allocation0 [shape = 'u32[]', space=smem, size = 0x4, offset = 0x4, fixed_abs, tag = 'smem constant byte address 0x4 - core index']
  #allocation1 [shape = 'u32[72,128]{1,0:T(1,128)}', space=vmem, size = 0x9000, scoped, tag = 'internal scratch']
  %s0 = inlined_call_operand.vmem [shape: f32[2,16,16,4], index: 0, kind: input, shape index: {}]
  %s1 = inlined_call_operand.vmem [shape: f32[2,4,16,16,4], index: 1, kind: output, shape index: {}]
  %s2 = sld [smem:[#allocation0]]
  $region37: #{tpu_custom_call.1} parent=0
    _
  %s4 = ssub.s32 1, %s2
  %s5 = scalar_select 0, %s4, %s2
  loop: start=0, step=1, limit=4
  $region2: #{tpu_custom_call.1} parent=0 // loop_pre_header
    _
  $region3: #{tpu_custom_call.1} parent=0 // loop_header
    %s7 = sphi 0, %s11
    %p8 = scmp.ge.s32.totalorder %s7, 4
    %s14 = sphi 0, %s26
    %s15 = sphi 0, %s22
    %s16 = sphi 0, %s14
    %s17 = sphi 0, %s15
    %s18 = sphi 0, %s16
    %s19 = sphi 0, %s17
    %s31 = sphi 0, %s33
    %s34 = sphi 0, %s31
    %s35 = sphi 0, %s34
    %s51 = sphi 0, %s35
    %s59 = sphi 0, %s61
    %s62 = sphi 0, %s59
    %s63 = sphi 0, %s62
    %s79 = sphi 0, %s63
  $region4: #{tpu_custom_call.1} parent=0 // loop_header_branch
    %10 = sbr.rel (%p8) target = $region8
  $region5: #{tpu_custom_call.1} parent=0 // loop_body
    %s12 = ssub.s32 %s7, 1
    %s13 = ssub.s32 %s7, 2
    %s20 = sadd.s32 1, %s15
    %p21 = scmp.ge.s32.totalorder %s20, 1
    %s22 = scalar_select %p21, 0, %s20
    %s23 = sadd.s32 1, %s14
    %s24 = scalar_select %p21, %s23, %s14
    %p25 = scmp.ge.s32.totalorder %s24, 2
    %s26 = scalar_select %p25, 0, %s24
    %s27 = ssub.s32 %s14, %s26
    %s28 = ssub.s32 %s15, %s22
    %s29 = sor.u32 %s27, %s28
    %p30 = scmp.eq.s32.totalorder %s29, 0
    %s32 = sadd.s32 %s31, 1
    %s33 = scalar_select %p30, %s31, %s32
    %p36 = pneg %p30
    %p37 = scmp.eq.s32.totalorder %s7, 1
    %p38 = por %p36, %p37
    %p39 = scmp.ne.s32.totalorder %s31, %s34
    %p40 = scmp.eq.s32.totalorder %s7, 0
    %p41 = por %p39, %p40
    %p42 = scmp.ne.s32.totalorder %s31, %s34
    %p43 = scmp.eq.s32.totalorder %s12, 1
    %p44 = por %p42, %p43
    %p45 = scmp.ne.s32.totalorder %s34, %s35
    %p46 = scmp.eq.s32.totalorder %s12, 0
    %p47 = por %p45, %p46
    %p48 = scmp.ne.s32.totalorder %s34, %s35
    %p49 = scmp.eq.s32.totalorder %s13, 1
    %p50 = por %p48, %p49
    %p52 = scmp.ne.s32.totalorder %s35, %s51
    %p53 = scmp.eq.s32.totalorder %s13, 0
    %p54 = por %p52, %p53
    %s55 = ssub.s32 %s14, %s26
    %s56 = ssub.s32 %s15, %s22
    %s57 = sor.u32 %s55, %s56
    %p58 = scmp.eq.s32.totalorder %s57, 0
    %s60 = sadd.s32 %s59, 1
    %s61 = scalar_select %p58, %s59, %s60
    %p64 = pneg %p58
    %p65 = scmp.eq.s32.totalorder %s7, 1
    %p66 = por %p64, %p65
    %p67 = scmp.ne.s32.totalorder %s59, %s62
    %p68 = scmp.eq.s32.totalorder %s7, 0
    %p69 = por %p67, %p68
    %p70 = scmp.ne.s32.totalorder %s59, %s62
    %p71 = scmp.eq.s32.totalorder %s12, 1
    %p72 = por %p70, %p71
    %p73 = scmp.ne.s32.totalorder %s62, %s63
    %p74 = scmp.eq.s32.totalorder %s12, 0
    %p75 = por %p73, %p74
    %p76 = scmp.ne.s32.totalorder %s62, %s63
    %p77 = scmp.eq.s32.totalorder %s13, 1
    %p78 = por %p76, %p77
    %p80 = scmp.ne.s32.totalorder %s63, %s79
    %p81 = scmp.eq.s32.totalorder %s13, 0
    %p82 = por %p80, %p81
    %p83 = scmp.le.s32.totalorder 1, %s7
    %p84 = scmp.lt.s32.totalorder %s7, 3
    %p85 = pnand %p83, %p84
    %p86 = pneg %p85
    // Predicated region
    $region9: #{tpu_custom_call.1} parent=5 // pred_check
      _
    $region10: #{tpu_custom_call.1} parent=5 // pred_check_branch
      %88 = sbr.rel (%p85) target = $region12
    $region11: #{tpu_custom_call.1} parent=5 // pred_region
      %s89 = ssub.s32 %s7, 1
    $region12: #{tpu_custom_call.1} parent=5 // pred_fallthru
      _
    %p90 = scmp.lt.s32.totalorder %s7, 2
    // Predicated region
    $region13: #{tpu_custom_call.1} parent=5 // pred_check
      %p91 = pneg %p90
    $region14: #{tpu_custom_call.1} parent=5 // pred_check_branch
      %93 = sbr.rel (%p91) target = $region16
    $region15: #{tpu_custom_call.1} parent=5 // pred_region
      // Predicated region
      $region17: #{tpu_custom_call.1} parent=15 // pred_check
        %p94 = pneg %p41
      $region18: #{tpu_custom_call.1} parent=15 // pred_check_branch
        %96 = sbr.rel (%p94) target = $region20
      $region19: #{tpu_custom_call.1} parent=15 // pred_region
        %p97 = scmp.lt.s32.totalorder %s14, 1
        %s98 = scalar_select %p97, %s14, 1
        %p99 = scmp.lt.s32.totalorder %s15, 0
        %s100 = scalar_select %p99, %s15, 0
        %s101 = smul.addr %s98, 32
        %s102 = sadd.s32 %s100, %s101
        %s103 = smul.addr %s102, 8
        %s104 = scalar_lea.vmem %s0, %s103
      $region20: #{tpu_custom_call.1} parent=15 // pred_fallthru
        _
    $region16: #{tpu_custom_call.1} parent=5 // pred_fallthru
      _
    %p105 = scmp.le.s32.totalorder 1, %s7
    %p106 = scmp.lt.s32.totalorder %s7, 3
    %p107 = pnand %p105, %p106
    %p108 = pneg %p107
    // Predicated region
    $region21: #{tpu_custom_call.1} parent=5 // pred_check
      _
    $region22: #{tpu_custom_call.1} parent=5 // pred_check_branch
      %110 = sbr.rel (%p107) target = $region24
    $region23: #{tpu_custom_call.1} parent=5 // pred_region
      %s111 = ssub.s32 %s7, 1
      %p112 = scmp.lt.s32.totalorder %s16, 1
      %s113 = scalar_select %p112, %s16, 1
      %p114 = scmp.lt.s32.totalorder %s17, 0
      %s115 = scalar_select %p114, %s17, 0
      %s116 = smul.addr %s113, 32
      %s117 = sadd.s32 %s115, %s116
      %s118 = smul.addr %s117, 8
      %s119 = scalar_lea.vmem %s0, %s118
      %p120 = pneg %p47
      %p121 = pneg %p44
      %p122 = pneg %p75
      %p123 = pneg %p72
      %p124 = scmp.lt.s32.totalorder %s16, 1
      %s125 = scalar_select %p124, %s16, 1
      %p126 = scmp.lt.s32.totalorder %s17, 0
      %s127 = scalar_select %p126, %s17, 0
      %s128 = smul.addr %s125, 128
      %s129 = sadd.s32 %s127, %s128
      %s130 = smul.addr %s129, 8
      %s131 = scalar_lea.vmem %s1, %s130
      %p132 = scmp.lt.s32.totalorder %s16, 1
      %s133 = scalar_select %p132, %s16, 1
      %p134 = scmp.lt.s32.totalorder %s17, 0
      %s135 = scalar_select %p134, %s17, 0
      %s136 = smul.addr %s133, 32
      %s137 = sadd.s32 %s135, %s136
      %s138 = smul.addr %s137, 8
      %s139 = scalar_lea.vmem %s0, %s138
      %p140 = scmp.lt.s32.totalorder %s16, 1
      %s141 = scalar_select %p140, %s16, 1
      %p142 = scmp.lt.s32.totalorder %s17, 0
      %s143 = scalar_select %p142, %s17, 0
      %s144 = smul.addr %s141, 128
      %s145 = sadd.s32 %s143, %s144
      %s146 = smul.addr %s145, 8
      %s147 = scalar_lea.vmem %s1, %s146
      %v148 = vld [vmem:[%s139] sm:$0xff]
      %v149 = vld [vmem:[%s139 + $0x8] sm:$0xff]
      %v150 = vld [vmem:[%s139 + $0x10] sm:$0xff]
      %v151 = vld [vmem:[%s139 + $0x18] sm:$0xff]
      %v152 = vld [vmem:[%s139 + $0x20] sm:$0xff]
      %v153 = vld [vmem:[%s139 + $0x28] sm:$0xff]
      %v154 = vld [vmem:[%s139 + $0x30] sm:$0xff]
      %v155 = vld [vmem:[%s139 + $0x38] sm:$0xff]
      %v156 = vld [vmem:[%s139 + $0x40] sm:$0xff]
      %v157 = vld [vmem:[%s139 + $0x48] sm:$0xff]
      %v158 = vld [vmem:[%s139 + $0x50] sm:$0xff]
      %v159 = vld [vmem:[%s139 + $0x58] sm:$0xff]
      %v160 = vld [vmem:[%s139 + $0x60] sm:$0xff]
      %v161 = vld [vmem:[%s139 + $0x68] sm:$0xff]
      %v162 = vld [vmem:[%s139 + $0x70] sm:$0xff]
      %v163 = vld [vmem:[%s139 + $0x78] sm:$0xff]
      %v164 = vld [vmem:[%s139 + $0x80] sm:$0xff]
      %v165 = vld [vmem:[%s139 + $0x88] sm:$0xff]
      %v166 = vld [vmem:[%s139 + $0x90] sm:$0xff]
      %v167 = vld [vmem:[%s139 + $0x98] sm:$0xff]
      %v168 = vld [vmem:[%s139 + $0xa0] sm:$0xff]
      %v169 = vld [vmem:[%s139 + $0xa8] sm:$0xff]
      %v170 = vld [vmem:[%s139 + $0xb0] sm:$0xff]
      %v171 = vld [vmem:[%s139 + $0xb8] sm:$0xff]
      %v172 = vld [vmem:[%s139 + $0xc0] sm:$0xff]
      %v173 = vld [vmem:[%s139 + $0xc8] sm:$0xff]
      %v174 = vld [vmem:[%s139 + $0xd0] sm:$0xff]
      %v175 = vld [vmem:[%s139 + $0xd8] sm:$0xff]
      %v176 = vld [vmem:[%s139 + $0xe0] sm:$0xff]
      %v177 = vld [vmem:[%s139 + $0xe8] sm:$0xff]
      %v178 = vld [vmem:[%s139 + $0xf0] sm:$0xff]
      %v179 = vld [vmem:[%s139 + $0xf8] sm:$0xff]
      %s180 = scalar_lea.vmem %s147, 768
      %vm181 = vcmask 31744
      %182 = vst.msk [vmem:[%s180] sm:$0xff] %vm181, %v148
      %183 = vst.msk [vmem:[%s180 + $0x8] sm:$0xff] %vm181, %v149
      %184 = vst.msk [vmem:[%s180 + $0x10] sm:$0xff] %vm181, %v150
      %185 = vst.msk [vmem:[%s180 + $0x18] sm:$0xff] %vm181, %v151
      %186 = vst.msk [vmem:[%s180 + $0x20] sm:$0xff] %vm181, %v152
      %187 = vst.msk [vmem:[%s180 + $0x28] sm:$0xff] %vm181, %v153
      %188 = vst.msk [vmem:[%s180 + $0x30] sm:$0xff] %vm181, %v154
      %189 = vst.msk [vmem:[%s180 + $0x38] sm:$0xff] %vm181, %v155
      %190 = vst.msk [vmem:[%s180 + $0x40] sm:$0xff] %vm181, %v156
      %191 = vst.msk [vmem:[%s180 + $0x48] sm:$0xff] %vm181, %v157
      %192 = vst.msk [vmem:[%s180 + $0x50] sm:$0xff] %vm181, %v158
      %193 = vst.msk [vmem:[%s180 + $0x58] sm:$0xff] %vm181, %v159
      %194 = vst.msk [vmem:[%s180 + $0x60] sm:$0xff] %vm181, %v160
      %195 = vst.msk [vmem:[%s180 + $0x68] sm:$0xff] %vm181, %v161
      %196 = vst.msk [vmem:[%s180 + $0x70] sm:$0xff] %vm181, %v162
      %197 = vst.msk [vmem:[%s180 + $0x78] sm:$0xff] %vm181, %v163
      %198 = vst.msk [vmem:[%s180 + $0x80] sm:$0xff] %vm181, %v164
      %199 = vst.msk [vmem:[%s180 + $0x88] sm:$0xff] %vm181, %v165
      %200 = vst.msk [vmem:[%s180 + $0x90] sm:$0xff] %vm181, %v166
      %201 = vst.msk [vmem:[%s180 + $0x98] sm:$0xff] %vm181, %v167
      %202 = vst.msk [vmem:[%s180 + $0xa0] sm:$0xff] %vm181, %v168
      %203 = vst.msk [vmem:[%s180 + $0xa8] sm:$0xff] %vm181, %v169
      %204 = vst.msk [vmem:[%s180 + $0xb0] sm:$0xff] %vm181, %v170
      %205 = vst.msk [vmem:[%s180 + $0xb8] sm:$0xff] %vm181, %v171
      %206 = vst.msk [vmem:[%s180 + $0xc0] sm:$0xff] %vm181, %v172
      %207 = vst.msk [vmem:[%s180 + $0xc8] sm:$0xff] %vm181, %v173
      %208 = vst.msk [vmem:[%s180 + $0xd0] sm:$0xff] %vm181, %v174
      %209 = vst.msk [vmem:[%s180 + $0xd8] sm:$0xff] %vm181, %v175
      %210 = vst.msk [vmem:[%s180 + $0xe0] sm:$0xff] %vm181, %v176
      %211 = vst.msk [vmem:[%s180 + $0xe8] sm:$0xff] %vm181, %v177
      %212 = vst.msk [vmem:[%s180 + $0xf0] sm:$0xff] %vm181, %v178
      %213 = vst.msk [vmem:[%s180 + $0xf8] sm:$0xff] %vm181, %v179
      %v214 = vmax.f32 %v148, %v150
      %v215 = vmax.f32 %v149, %v151
      %v216 = vmax.f32 %v150, %v152
      %v217 = vmax.f32 %v151, %v153
      %v218 = vmax.f32 %v152, %v154
      %v219 = vmax.f32 %v153, %v155
      %v220 = vmax.f32 %v154, %v156
      %v221 = vmax.f32 %v155, %v157
      %v222 = vmax.f32 %v156, %v158
      %v223 = vmax.f32 %v157, %v159
      %v224 = vmax.f32 %v158, %v160
      %v225 = vmax.f32 %v159, %v161
      %v226 = vmax.f32 %v160, %v162
      %v227 = vmax.f32 %v161, %v163
      %v228 = vmax.f32 %v162, %v164
      %v229 = vmax.f32 %v163, %v165
      %v230 = vmax.f32 %v164, %v166
      %v231 = vmax.f32 %v165, %v167
      %v232 = vmax.f32 %v166, %v168
      %v233 = vmax.f32 %v167, %v169
      %v234 = vmax.f32 %v168, %v170
      %v235 = vmax.f32 %v169, %v171
      %v236 = vmax.f32 %v170, %v172
      %v237 = vmax.f32 %v171, %v173
      %v238 = vmax.f32 %v172, %v174
      %v239 = vmax.f32 %v173, %v175
      %v240 = vmax.f32 %v174, %v176
      %v241 = vmax.f32 %v175, %v177
      %v242 = vmax.f32 %v176, %v178
      %v243 = vmax.f32 %v177, %v179
      %v244 = vmax.f32 %v216, %v148
      %v245 = vmax.f32 %v217, %v149
      %v246 = vmax.f32 %v218, %v150
      %v247 = vmax.f32 %v219, %v151
      %v248 = vmax.f32 %v220, %v152
      %v249 = vmax.f32 %v221, %v153
      %v250 = vmax.f32 %v222, %v154
      %v251 = vmax.f32 %v223, %v155
      %v252 = vmax.f32 %v224, %v156
      %v253 = vmax.f32 %v225, %v157
      %v254 = vmax.f32 %v226, %v158
      %v255 = vmax.f32 %v227, %v159
      %v256 = vmax.f32 %v228, %v160
      %v257 = vmax.f32 %v229, %v161
      %v258 = vmax.f32 %v230, %v162
      %v259 = vmax.f32 %v231, %v163
      %v260 = vmax.f32 %v232, %v164
      %v261 = vmax.f32 %v233, %v165
      %v262 = vmax.f32 %v234, %v166
      %v263 = vmax.f32 %v235, %v167
      %v264 = vmax.f32 %v236, %v168
      %v265 = vmax.f32 %v237, %v169
      %v266 = vmax.f32 %v238, %v170
      %v267 = vmax.f32 %v239, %v171
      %v268 = vmax.f32 %v240, %v172
      %v269 = vmax.f32 %v241, %v173
      %v270 = vmax.f32 %v242, %v174
      %v271 = vmax.f32 %v243, %v175
      %v272 = vmax.f32 %v214, %v152
      %v273 = vmax.f32 %v215, %v153
      %v274 = vmax.f32 %v244, %v154
      %v275 = vmax.f32 %v245, %v155
      %v276 = vmax.f32 %v246, %v156
      %v277 = vmax.f32 %v247, %v157
      %v278 = vmax.f32 %v248, %v158
      %v279 = vmax.f32 %v249, %v159
      %v280 = vmax.f32 %v250, %v160
      %v281 = vmax.f32 %v251, %v161
      %v282 = vmax.f32 %v252, %v162
      %v283 = vmax.f32 %v253, %v163
      %v284 = vmax.f32 %v254, %v164
      %v285 = vmax.f32 %v255, %v165
      %v286 = vmax.f32 %v256, %v166
      %v287 = vmax.f32 %v257, %v167
      %v288 = vmax.f32 %v258, %v168
      %v289 = vmax.f32 %v259, %v169
      %v290 = vmax.f32 %v260, %v170
      %v291 = vmax.f32 %v261, %v171
      %v292 = vmax.f32 %v262, %v172
      %v293 = vmax.f32 %v263, %v173
      %v294 = vmax.f32 %v264, %v174
      %v295 = vmax.f32 %v265, %v175
      %v296 = vmax.f32 %v266, %v176
      %v297 = vmax.f32 %v267, %v177
      %v298 = vmax.f32 %v268, %v178
      %v299 = vmax.f32 %v269, %v179
      %v300 = vmax.f32 %v276, %v148
      %v301 = vmax.f32 %v277, %v149
      %v302 = vmax.f32 %v278, %v150
      %v303 = vmax.f32 %v279, %v151
      %v304 = vmax.f32 %v280, %v152
      %v305 = vmax.f32 %v281, %v153
      %v306 = vmax.f32 %v282, %v154
      %v307 = vmax.f32 %v283, %v155
      %v308 = vmax.f32 %v284, %v156
      %v309 = vmax.f32 %v285, %v157
      %v310 = vmax.f32 %v286, %v158
      %v311 = vmax.f32 %v287, %v159
      %v312 = vmax.f32 %v288, %v160
      %v313 = vmax.f32 %v289, %v161
      %v314 = vmax.f32 %v290, %v162
      %v315 = vmax.f32 %v291, %v163
      %v316 = vmax.f32 %v292, %v164
      %v317 = vmax.f32 %v293, %v165
      %v318 = vmax.f32 %v294, %v166
      %v319 = vmax.f32 %v295, %v167
      %v320 = vmax.f32 %v296, %v168
      %v321 = vmax.f32 %v297, %v169
      %v322 = vmax.f32 %v298, %v170
      %v323 = vmax.f32 %v299, %v171
      %v324 = vmax.f32 %v270, %v172
      %v325 = vmax.f32 %v271, %v173
      %vm358 = vcmask 1046528
      %v359 = vrot.slane %v272, 1
      %v360 = vrot.slane %v273, 1
      %v361 = vsel %vm358, %v359, %v360
      %v362 = vrot.slane %v274, 1
      %v363 = vrot.slane %v275, 1
      %v364 = vsel %vm358, %v362, %v363
      %v365 = vrot.slane %v300, 1
      %v366 = vrot.slane %v301, 1
      %v367 = vsel %vm358, %v365, %v366
      %v368 = vrot.slane %v302, 1
      %v369 = vrot.slane %v303, 1
      %v370 = vsel %vm358, %v368, %v369
      %v371 = vrot.slane %v304, 1
      %v372 = vrot.slane %v305, 1
      %v373 = vsel %vm358, %v371, %v372
      %v374 = vrot.slane %v306, 1
      %v375 = vrot.slane %v307, 1
      %v376 = vsel %vm358, %v374, %v375
      %v377 = vrot.slane %v308, 1
      %v378 = vrot.slane %v309, 1
      %v379 = vsel %vm358, %v377, %v378
      %v380 = vrot.slane %v310, 1
      %v381 = vrot.slane %v311, 1
      %v382 = vsel %vm358, %v380, %v381
      %v383 = vrot.slane %v312, 1
      %v384 = vrot.slane %v313, 1
      %v385 = vsel %vm358, %v383, %v384
      %v386 = vrot.slane %v314, 1
      %v387 = vrot.slane %v315, 1
      %v388 = vsel %vm358, %v386, %v387
      %v389 = vrot.slane %v316, 1
      %v390 = vrot.slane %v317, 1
      %v391 = vsel %vm358, %v389, %v390
      %v392 = vrot.slane %v318, 1
      %v393 = vrot.slane %v319, 1
      %v394 = vsel %vm358, %v392, %v393
      %v395 = vrot.slane %v320, 1
      %v396 = vrot.slane %v321, 1
      %v397 = vsel %vm358, %v395, %v396
      %v398 = vrot.slane %v322, 1
      %v399 = vrot.slane %v323, 1
      %v400 = vsel %vm358, %v398, %v399
      %v401 = vrot.slane %v324, 1
      %v402 = vrot.slane %v325, 1
      %v403 = vsel %vm358, %v401, %v402
      %v404 = vrot.slane %v270, 1
      %v405 = vrot.slane %v271, 1
      %v406 = vsel %vm358, %v404, %v405
      %v439 = vsel %vm358, %v360, -inf
      %v440 = vsel %vm358, %v363, -inf
      %v441 = vsel %vm358, %v366, -inf
      %v442 = vsel %vm358, %v369, -inf
      %v443 = vsel %vm358, %v372, -inf
      %v444 = vsel %vm358, %v375, -inf
      %v445 = vsel %vm358, %v378, -inf
      %v446 = vsel %vm358, %v381, -inf
      %v447 = vsel %vm358, %v384, -inf
      %v448 = vsel %vm358, %v387, -inf
      %v449 = vsel %vm358, %v390, -inf
      %v450 = vsel %vm358, %v393, -inf
      %v451 = vsel %vm358, %v396, -inf
      %v452 = vsel %vm358, %v399, -inf
      %v453 = vsel %vm358, %v402, -inf
      %v454 = vsel %vm358, %v405, -inf
      %v455 = vmax.f32 %v272, %v361
      %v456 = vmax.f32 %v273, %v439
      %v457 = vmax.f32 %v274, %v364
      %v458 = vmax.f32 %v275, %v440
      %v459 = vmax.f32 %v300, %v367
      %v460 = vmax.f32 %v301, %v441
      %v461 = vmax.f32 %v302, %v370
      %v462 = vmax.f32 %v303, %v442
      %v463 = vmax.f32 %v304, %v373
      %v464 = vmax.f32 %v305, %v443
      %v465 = vmax.f32 %v306, %v376
      %v466 = vmax.f32 %v307, %v444
      %v467 = vmax.f32 %v308, %v379
      %v468 = vmax.f32 %v309, %v445
      %v469 = vmax.f32 %v310, %v382
      %v470 = vmax.f32 %v311, %v446
      %v471 = vmax.f32 %v312, %v385
      %v472 = vmax.f32 %v313, %v447
      %v473 = vmax.f32 %v314, %v388
      %v474 = vmax.f32 %v315, %v448
      %v475 = vmax.f32 %v316, %v391
      %v476 = vmax.f32 %v317, %v449
      %v477 = vmax.f32 %v318, %v394
      %v478 = vmax.f32 %v319, %v450
      %v479 = vmax.f32 %v320, %v397
      %v480 = vmax.f32 %v321, %v451
      %v481 = vmax.f32 %v322, %v400
      %v482 = vmax.f32 %v323, %v452
      %v483 = vmax.f32 %v324, %v403
      %v484 = vmax.f32 %v325, %v453
      %v485 = vmax.f32 %v270, %v406
      %v486 = vmax.f32 %v271, %v454
      %vm487 = vcmask 1040384
      %v488 = vrot.slane %v272, 7
      %v489 = vrot.slane %v273, 7
      %v490 = vsel %vm487, %v488, %v489
      %v491 = vrot.slane %v274, 7
      %v492 = vrot.slane %v275, 7
      %v493 = vsel %vm487, %v491, %v492
      %v494 = vrot.slane %v300, 7
      %v495 = vrot.slane %v301, 7
      %v496 = vsel %vm487, %v494, %v495
      %v497 = vrot.slane %v302, 7
      %v498 = vrot.slane %v303, 7
      %v499 = vsel %vm487, %v497, %v498
      %v500 = vrot.slane %v304, 7
      %v501 = vrot.slane %v305, 7
      %v502 = vsel %vm487, %v500, %v501
      %v503 = vrot.slane %v306, 7
      %v504 = vrot.slane %v307, 7
      %v505 = vsel %vm487, %v503, %v504
      %v506 = vrot.slane %v308, 7
      %v507 = vrot.slane %v309, 7
      %v508 = vsel %vm487, %v506, %v507
      %v509 = vrot.slane %v310, 7
      %v510 = vrot.slane %v311, 7
      %v511 = vsel %vm487, %v509, %v510
      %v512 = vrot.slane %v312, 7
      %v513 = vrot.slane %v313, 7
      %v514 = vsel %vm487, %v512, %v513
      %v515 = vrot.slane %v314, 7
      %v516 = vrot.slane %v315, 7
      %v517 = vsel %vm487, %v515, %v516
      %v518 = vrot.slane %v316, 7
      %v519 = vrot.slane %v317, 7
      %v520 = vsel %vm487, %v518, %v519
      %v521 = vrot.slane %v318, 7
      %v522 = vrot.slane %v319, 7
      %v523 = vsel %vm487, %v521, %v522
      %v524 = vrot.slane %v320, 7
      %v525 = vrot.slane %v321, 7
      %v526 = vsel %vm487, %v524, %v525
      %v527 = vrot.slane %v322, 7
      %v528 = vrot.slane %v323, 7
      %v529 = vsel %vm487, %v527, %v528
      %v530 = vrot.slane %v324, 7
      %v531 = vrot.slane %v325, 7
      %v532 = vsel %vm487, %v530, %v531
      %v533 = vrot.slane %v270, 7
      %v534 = vrot.slane %v271, 7
      %v535 = vsel %vm487, %v533, %v534
      %v568 = vsel %vm487, -inf, %v488
      %v569 = vsel %vm487, -inf, %v491
      %v570 = vsel %vm487, -inf, %v494
      %v571 = vsel %vm487, -inf, %v497
      %v572 = vsel %vm487, -inf, %v500
      %v573 = vsel %vm487, -inf, %v503
      %v574 = vsel %vm487, -inf, %v506
      %v575 = vsel %vm487, -inf, %v509
      %v576 = vsel %vm487, -inf, %v512
      %v577 = vsel %vm487, -inf, %v515
      %v578 = vsel %vm487, -inf, %v518
      %v579 = vsel %vm487, -inf, %v521
      %v580 = vsel %vm487, -inf, %v524
      %v581 = vsel %vm487, -inf, %v527
      %v582 = vsel %vm487, -inf, %v530
      %v583 = vsel %vm487, -inf, %v533
      %v584 = vmax.f32 %v455, %v568
      %v585 = vmax.f32 %v456, %v490
      %v586 = vmax.f32 %v457, %v569
      %v587 = vmax.f32 %v458, %v493
      %v588 = vmax.f32 %v459, %v570
      %v589 = vmax.f32 %v460, %v496
      %v590 = vmax.f32 %v461, %v571
      %v591 = vmax.f32 %v462, %v499
      %v592 = vmax.f32 %v463, %v572
      %v593 = vmax.f32 %v464, %v502
      %v594 = vmax.f32 %v465, %v573
      %v595 = vmax.f32 %v466, %v505
      %v596 = vmax.f32 %v467, %v574
      %v597 = vmax.f32 %v468, %v508
      %v598 = vmax.f32 %v469, %v575
      %v599 = vmax.f32 %v470, %v511
      %v600 = vmax.f32 %v471, %v576
      %v601 = vmax.f32 %v472, %v514
      %v602 = vmax.f32 %v473, %v577
      %v603 = vmax.f32 %v474, %v517
      %v604 = vmax.f32 %v475, %v578
      %v605 = vmax.f32 %v476, %v520
      %v606 = vmax.f32 %v477, %v579
      %v607 = vmax.f32 %v478, %v523
      %v608 = vmax.f32 %v479, %v580
      %v609 = vmax.f32 %v480, %v526
      %v610 = vmax.f32 %v481, %v581
      %v611 = vmax.f32 %v482, %v529
      %v612 = vmax.f32 %v483, %v582
      %v613 = vmax.f32 %v484, %v532
      %v614 = vmax.f32 %v485, %v583
      %v615 = vmax.f32 %v486, %v535
      %vm616 = vcmask 1045504
      %v617 = vrot.slane %v272, 2
      %v618 = vrot.slane %v273, 2
      %v619 = vsel %vm616, %v617, %v618
      %v620 = vrot.slane %v274, 2
      %v621 = vrot.slane %v275, 2
      %v622 = vsel %vm616, %v620, %v621
      %v623 = vrot.slane %v300, 2
      %v624 = vrot.slane %v301, 2
      %v625 = vsel %vm616, %v623, %v624
      %v626 = vrot.slane %v302, 2
      %v627 = vrot.slane %v303, 2
      %v628 = vsel %vm616, %v626, %v627
      %v629 = vrot.slane %v304, 2
      %v630 = vrot.slane %v305, 2
      %v631 = vsel %vm616, %v629, %v630
      %v632 = vrot.slane %v306, 2
      %v633 = vrot.slane %v307, 2
      %v634 = vsel %vm616, %v632, %v633
      %v635 = vrot.slane %v308, 2
      %v636 = vrot.slane %v309, 2
      %v637 = vsel %vm616, %v635, %v636
      %v638 = vrot.slane %v310, 2
      %v639 = vrot.slane %v311, 2
      %v640 = vsel %vm616, %v638, %v639
      %v641 = vrot.slane %v312, 2
      %v642 = vrot.slane %v313, 2
      %v643 = vsel %vm616, %v641, %v642
      %v644 = vrot.slane %v314, 2
      %v645 = vrot.slane %v315, 2
      %v646 = vsel %vm616, %v644, %v645
      %v647 = vrot.slane %v316, 2
      %v648 = vrot.slane %v317, 2
      %v649 = vsel %vm616, %v647, %v648
      %v650 = vrot.slane %v318, 2
      %v651 = vrot.slane %v319, 2
      %v652 = vsel %vm616, %v650, %v651
      %v653 = vrot.slane %v320, 2
      %v654 = vrot.slane %v321, 2
      %v655 = vsel %vm616, %v653, %v654
      %v656 = vrot.slane %v322, 2
      %v657 = vrot.slane %v323, 2
      %v658 = vsel %vm616, %v656, %v657
      %v659 = vrot.slane %v324, 2
      %v660 = vrot.slane %v325, 2
      %v661 = vsel %vm616, %v659, %v660
      %v662 = vrot.slane %v270, 2
      %v663 = vrot.slane %v271, 2
      %v664 = vsel %vm616, %v662, %v663
      %v697 = vsel %vm616, %v618, -inf
      %v698 = vsel %vm616, %v621, -inf
      %v699 = vsel %vm616, %v624, -inf
      %v700 = vsel %vm616, %v627, -inf
      %v701 = vsel %vm616, %v630, -inf
      %v702 = vsel %vm616, %v633, -inf
      %v703 = vsel %vm616, %v636, -inf
      %v704 = vsel %vm616, %v639, -inf
      %v705 = vsel %vm616, %v642, -inf
      %v706 = vsel %vm616, %v645, -inf
      %v707 = vsel %vm616, %v648, -inf
      %v708 = vsel %vm616, %v651, -inf
      %v709 = vsel %vm616, %v654, -inf
      %v710 = vsel %vm616, %v657, -inf
      %v711 = vsel %vm616, %v660, -inf
      %v712 = vsel %vm616, %v663, -inf
      %v713 = vmax.f32 %v584, %v619
      %v714 = vmax.f32 %v585, %v697
      %v715 = vmax.f32 %v586, %v622
      %v716 = vmax.f32 %v587, %v698
      %v717 = vmax.f32 %v588, %v625
      %v718 = vmax.f32 %v589, %v699
      %v719 = vmax.f32 %v590, %v628
      %v720 = vmax.f32 %v591, %v700
      %v721 = vmax.f32 %v592, %v631
      %v722 = vmax.f32 %v593, %v701
      %v723 = vmax.f32 %v594, %v634
      %v724 = vmax.f32 %v595, %v702
      %v725 = vmax.f32 %v596, %v637
      %v726 = vmax.f32 %v597, %v703
      %v727 = vmax.f32 %v598, %v640
      %v728 = vmax.f32 %v599, %v704
      %v729 = vmax.f32 %v600, %v643
      %v730 = vmax.f32 %v601, %v705
      %v731 = vmax.f32 %v602, %v646
      %v732 = vmax.f32 %v603, %v706
      %v733 = vmax.f32 %v604, %v649
      %v734 = vmax.f32 %v605, %v707
      %v735 = vmax.f32 %v606, %v652
      %v736 = vmax.f32 %v607, %v708
      %v737 = vmax.f32 %v608, %v655
      %v738 = vmax.f32 %v609, %v709
      %v739 = vmax.f32 %v610, %v658
      %v740 = vmax.f32 %v611, %v710
      %v741 = vmax.f32 %v612, %v661
      %v742 = vmax.f32 %v613, %v711
      %v743 = vmax.f32 %v614, %v664
      %v744 = vmax.f32 %v615, %v712
      %vm745 = vcmask 1041408
      %v746 = vrot.slane %v272, 6
      %v747 = vrot.slane %v273, 6
      %v748 = vsel %vm745, %v746, %v747
      %v749 = vrot.slane %v274, 6
      %v750 = vrot.slane %v275, 6
      %v751 = vsel %vm745, %v749, %v750
      %v752 = vrot.slane %v300, 6
      %v753 = vrot.slane %v301, 6
      %v754 = vsel %vm745, %v752, %v753
      %v755 = vrot.slane %v302, 6
      %v756 = vrot.slane %v303, 6
      %v757 = vsel %vm745, %v755, %v756
      %v758 = vrot.slane %v304, 6
      %v759 = vrot.slane %v305, 6
      %v760 = vsel %vm745, %v758, %v759
      %v761 = vrot.slane %v306, 6
      %v762 = vrot.slane %v307, 6
      %v763 = vsel %vm745, %v761, %v762
      %v764 = vrot.slane %v308, 6
      %v765 = vrot.slane %v309, 6
      %v766 = vsel %vm745, %v764, %v765
      %v767 = vrot.slane %v310, 6
      %v768 = vrot.slane %v311, 6
      %v769 = vsel %vm745, %v767, %v768
      %v770 = vrot.slane %v312, 6
      %v771 = vrot.slane %v313, 6
      %v772 = vsel %vm745, %v770, %v771
      %v773 = vrot.slane %v314, 6
      %v774 = vrot.slane %v315, 6
      %v775 = vsel %vm745, %v773, %v774
      %v776 = vrot.slane %v316, 6
      %v777 = vrot.slane %v317, 6
      %v778 = vsel %vm745, %v776, %v777
      %v779 = vrot.slane %v318, 6
      %v780 = vrot.slane %v319, 6
      %v781 = vsel %vm745, %v779, %v780
      %v782 = vrot.slane %v320, 6
      %v783 = vrot.slane %v321, 6
      %v784 = vsel %vm745, %v782, %v783
      %v785 = vrot.slane %v322, 6
      %v786 = vrot.slane %v323, 6
      %v787 = vsel %vm745, %v785, %v786
      %v788 = vrot.slane %v324, 6
      %v789 = vrot.slane %v325, 6
      %v790 = vsel %vm745, %v788, %v789
      %v791 = vrot.slane %v270, 6
      %v792 = vrot.slane %v271, 6
      %v793 = vsel %vm745, %v791, %v792
      %v826 = vsel %vm745, -inf, %v746
      %v827 = vsel %vm745, -inf, %v749
      %v828 = vsel %vm745, -inf, %v752
      %v829 = vsel %vm745, -inf, %v755
      %v830 = vsel %vm745, -inf, %v758
      %v831 = vsel %vm745, -inf, %v761
      %v832 = vsel %vm745, -inf, %v764
      %v833 = vsel %vm745, -inf, %v767
      %v834 = vsel %vm745, -inf, %v770
      %v835 = vsel %vm745, -inf, %v773
      %v836 = vsel %vm745, -inf, %v776
      %v837 = vsel %vm745, -inf, %v779
      %v838 = vsel %vm745, -inf, %v782
      %v839 = vsel %vm745, -inf, %v785
      %v840 = vsel %vm745, -inf, %v788
      %v841 = vsel %vm745, -inf, %v791
      %v842 = vmax.f32 %v713, %v826
      %v843 = vmax.f32 %v714, %v748
      %v844 = vmax.f32 %v715, %v827
      %v845 = vmax.f32 %v716, %v751
      %v846 = vmax.f32 %v717, %v828
      %v847 = vmax.f32 %v718, %v754
      %v848 = vmax.f32 %v719, %v829
      %v849 = vmax.f32 %v720, %v757
      %v850 = vmax.f32 %v721, %v830
      %v851 = vmax.f32 %v722, %v760
      %v852 = vmax.f32 %v723, %v831
      %v853 = vmax.f32 %v724, %v763
      %v854 = vmax.f32 %v725, %v832
      %v855 = vmax.f32 %v726, %v766
      %v856 = vmax.f32 %v727, %v833
      %v857 = vmax.f32 %v728, %v769
      %v858 = vmax.f32 %v729, %v834
      %v859 = vmax.f32 %v730, %v772
      %v860 = vmax.f32 %v731, %v835
      %v861 = vmax.f32 %v732, %v775
      %v862 = vmax.f32 %v733, %v836
      %v863 = vmax.f32 %v734, %v778
      %v864 = vmax.f32 %v735, %v837
      %v865 = vmax.f32 %v736, %v781
      %v866 = vmax.f32 %v737, %v838
      %v867 = vmax.f32 %v738, %v784
      %v868 = vmax.f32 %v739, %v839
      %v869 = vmax.f32 %v740, %v787
      %v870 = vmax.f32 %v741, %v840
      %v871 = vmax.f32 %v742, %v790
      %v872 = vmax.f32 %v743, %v841
      %v873 = vmax.f32 %v744, %v793
      %874 = vst.msk [vmem:[%s147] sm:$0xff] %vm181, %v842
      %875 = vst.msk [vmem:[%s147 + $0x8] sm:$0xff] %vm181, %v843
      %876 = vst.msk [vmem:[%s147 + $0x10] sm:$0xff] %vm181, %v844
      %877 = vst.msk [vmem:[%s147 + $0x18] sm:$0xff] %vm181, %v845
      %878 = vst.msk [vmem:[%s147 + $0x20] sm:$0xff] %vm181, %v846
      %879 = vst.msk [vmem:[%s147 + $0x28] sm:$0xff] %vm181, %v847
      %880 = vst.msk [vmem:[%s147 + $0x30] sm:$0xff] %vm181, %v848
      %881 = vst.msk [vmem:[%s147 + $0x38] sm:$0xff] %vm181, %v849
      %882 = vst.msk [vmem:[%s147 + $0x40] sm:$0xff] %vm181, %v850
      %883 = vst.msk [vmem:[%s147 + $0x48] sm:$0xff] %vm181, %v851
      %884 = vst.msk [vmem:[%s147 + $0x50] sm:$0xff] %vm181, %v852
      %885 = vst.msk [vmem:[%s147 + $0x58] sm:$0xff] %vm181, %v853
      %886 = vst.msk [vmem:[%s147 + $0x60] sm:$0xff] %vm181, %v854
      %887 = vst.msk [vmem:[%s147 + $0x68] sm:$0xff] %vm181, %v855
      %888 = vst.msk [vmem:[%s147 + $0x70] sm:$0xff] %vm181, %v856
      %889 = vst.msk [vmem:[%s147 + $0x78] sm:$0xff] %vm181, %v857
      %890 = vst.msk [vmem:[%s147 + $0x80] sm:$0xff] %vm181, %v858
      %891 = vst.msk [vmem:[%s147 + $0x88] sm:$0xff] %vm181, %v859
      %892 = vst.msk [vmem:[%s147 + $0x90] sm:$0xff] %vm181, %v860
      %893 = vst.msk [vmem:[%s147 + $0x98] sm:$0xff] %vm181, %v861
      %894 = vst.msk [vmem:[%s147 + $0xa0] sm:$0xff] %vm181, %v862
      %895 = vst.msk [vmem:[%s147 + $0xa8] sm:$0xff] %vm181, %v863
      %896 = vst.msk [vmem:[%s147 + $0xb0] sm:$0xff] %vm181, %v864
      %897 = vst.msk [vmem:[%s147 + $0xb8] sm:$0xff] %vm181, %v865
      %898 = vst.msk [vmem:[%s147 + $0xc0] sm:$0xff] %vm181, %v866
      %899 = vst.msk [vmem:[%s147 + $0xc8] sm:$0xff] %vm181, %v867
      %900 = vst.msk [vmem:[%s147 + $0xd0] sm:$0xff] %vm181, %v868
      %901 = vst.msk [vmem:[%s147 + $0xd8] sm:$0xff] %vm181, %v869
      %902 = vst.msk [vmem:[%s147 + $0xe0] sm:$0xff] %vm181, %v870
      %903 = vst.msk [vmem:[%s147 + $0xe8] sm:$0xff] %vm181, %v871
      %904 = vst.msk [vmem:[%s147 + $0xf0] sm:$0xff] %vm181, %v872
      %905 = vst.msk [vmem:[%s147 + $0xf8] sm:$0xff] %vm181, %v873
      %v906 = vmax.f32 %v842, %v844
      %v907 = vmax.f32 %v843, %v845
      %v908 = vmax.f32 %v844, %v846
      %v909 = vmax.f32 %v845, %v847
      %v910 = vmax.f32 %v846, %v848
      %v911 = vmax.f32 %v847, %v849
      %v912 = vmax.f32 %v848, %v850
      %v913 = vmax.f32 %v849, %v851
      %v914 = vmax.f32 %v850, %v852
      %v915 = vmax.f32 %v851, %v853
      %v916 = vmax.f32 %v852, %v854
      %v917 = vmax.f32 %v853, %v855
      %v918 = vmax.f32 %v854, %v856
      %v919 = vmax.f32 %v855, %v857
      %v920 = vmax.f32 %v856, %v858
      %v921 = vmax.f32 %v857, %v859
      %v922 = vmax.f32 %v858, %v860
      %v923 = vmax.f32 %v859, %v861
      %v924 = vmax.f32 %v860, %v862
      %v925 = vmax.f32 %v861, %v863
      %v926 = vmax.f32 %v862, %v864
      %v927 = vmax.f32 %v863, %v865
      %v928 = vmax.f32 %v864, %v866
      %v929 = vmax.f32 %v865, %v867
      %v930 = vmax.f32 %v866, %v868
      %v931 = vmax.f32 %v867, %v869
      %v932 = vmax.f32 %v868, %v870
      %v933 = vmax.f32 %v869, %v871
      %v934 = vmax.f32 %v870, %v872
      %v935 = vmax.f32 %v871, %v873
      %v936 = vmax.f32 %v908, %v842
      %v937 = vmax.f32 %v909, %v843
      %v938 = vmax.f32 %v910, %v844
      %v939 = vmax.f32 %v911, %v845
      %v940 = vmax.f32 %v912, %v846
      %v941 = vmax.f32 %v913, %v847
      %v942 = vmax.f32 %v914, %v848
      %v943 = vmax.f32 %v915, %v849
      %v944 = vmax.f32 %v916, %v850
      %v945 = vmax.f32 %v917, %v851
      %v946 = vmax.f32 %v918, %v852
      %v947 = vmax.f32 %v919, %v853
      %v948 = vmax.f32 %v920, %v854
      %v949 = vmax.f32 %v921, %v855
      %v950 = vmax.f32 %v922, %v856
      %v951 = vmax.f32 %v923, %v857
      %v952 = vmax.f32 %v924, %v858
      %v953 = vmax.f32 %v925, %v859
      %v954 = vmax.f32 %v926, %v860
      %v955 = vmax.f32 %v927, %v861
      %v956 = vmax.f32 %v928, %v862
      %v957 = vmax.f32 %v929, %v863
      %v958 = vmax.f32 %v930, %v864
      %v959 = vmax.f32 %v931, %v865
      %v960 = vmax.f32 %v932, %v866
      %v961 = vmax.f32 %v933, %v867
      %v962 = vmax.f32 %v934, %v868
      %v963 = vmax.f32 %v935, %v869
      %v964 = vmax.f32 %v906, %v846
      %v965 = vmax.f32 %v907, %v847
      %v966 = vmax.f32 %v936, %v848
      %v967 = vmax.f32 %v937, %v849
      %v968 = vmax.f32 %v938, %v850
      %v969 = vmax.f32 %v939, %v851
      %v970 = vmax.f32 %v940, %v852
      %v971 = vmax.f32 %v941, %v853
      %v972 = vmax.f32 %v942, %v854
      %v973 = vmax.f32 %v943, %v855
      %v974 = vmax.f32 %v944, %v856
      %v975 = vmax.f32 %v945, %v857
      %v976 = vmax.f32 %v946, %v858
      %v977 = vmax.f32 %v947, %v859
      %v978 = vmax.f32 %v948, %v860
      %v979 = vmax.f32 %v949, %v861
      %v980 = vmax.f32 %v950, %v862
      %v981 = vmax.f32 %v951, %v863
      %v982 = vmax.f32 %v952, %v864
      %v983 = vmax.f32 %v953, %v865
      %v984 = vmax.f32 %v954, %v866
      %v985 = vmax.f32 %v955, %v867
      %v986 = vmax.f32 %v956, %v868
      %v987 = vmax.f32 %v957, %v869
      %v988 = vmax.f32 %v958, %v870
      %v989 = vmax.f32 %v959, %v871
      %v990 = vmax.f32 %v960, %v872
      %v991 = vmax.f32 %v961, %v873
      %v992 = vmax.f32 %v968, %v842
      %v993 = vmax.f32 %v969, %v843
      %v994 = vmax.f32 %v970, %v844
      %v995 = vmax.f32 %v971, %v845
      %v996 = vmax.f32 %v972, %v846
      %v997 = vmax.f32 %v973, %v847
      %v998 = vmax.f32 %v974, %v848
      %v999 = vmax.f32 %v975, %v849
      %v1000 = vmax.f32 %v976, %v850
      %v1001 = vmax.f32 %v977, %v851
      %v1002 = vmax.f32 %v978, %v852
      %v1003 = vmax.f32 %v979, %v853
      %v1004 = vmax.f32 %v980, %v854
      %v1005 = vmax.f32 %v981, %v855
      %v1006 = vmax.f32 %v982, %v856
      %v1007 = vmax.f32 %v983, %v857
      %v1008 = vmax.f32 %v984, %v858
      %v1009 = vmax.f32 %v985, %v859
      %v1010 = vmax.f32 %v986, %v860
      %v1011 = vmax.f32 %v987, %v861
      %v1012 = vmax.f32 %v988, %v862
      %v1013 = vmax.f32 %v989, %v863
      %v1014 = vmax.f32 %v990, %v864
      %v1015 = vmax.f32 %v991, %v865
      %v1016 = vmax.f32 %v962, %v866
      %v1017 = vmax.f32 %v963, %v867
      %v1050 = vrot.slane %v964, 1
      %v1051 = vrot.slane %v965, 1
      %v1052 = vsel %vm358, %v1050, %v1051
      %v1053 = vrot.slane %v966, 1
      %v1054 = vrot.slane %v967, 1
      %v1055 = vsel %vm358, %v1053, %v1054
      %v1056 = vrot.slane %v992, 1
      %v1057 = vrot.slane %v993, 1
      %v1058 = vsel %vm358, %v1056, %v1057
      %v1059 = vrot.slane %v994, 1
      %v1060 = vrot.slane %v995, 1
      %v1061 = vsel %vm358, %v1059, %v1060
      %v1062 = vrot.slane %v996, 1
      %v1063 = vrot.slane %v997, 1
      %v1064 = vsel %vm358, %v1062, %v1063
      %v1065 = vrot.slane %v998, 1
      %v1066 = vrot.slane %v999, 1
      %v1067 = vsel %vm358, %v1065, %v1066
      %v1068 = vrot.slane %v1000, 1
      %v1069 = vrot.slane %v1001, 1
      %v1070 = vsel %vm358, %v1068, %v1069
      %v1071 = vrot.slane %v1002, 1
      %v1072 = vrot.slane %v1003, 1
      %v1073 = vsel %vm358, %v1071, %v1072
      %v1074 = vrot.slane %v1004, 1
      %v1075 = vrot.slane %v1005, 1
      %v1076 = vsel %vm358, %v1074, %v1075
      %v1077 = vrot.slane %v1006, 1
      %v1078 = vrot.slane %v1007, 1
      %v1079 = vsel %vm358, %v1077, %v1078
      %v1080 = vrot.slane %v1008, 1
      %v1081 = vrot.slane %v1009, 1
      %v1082 = vsel %vm358, %v1080, %v1081
      %v1083 = vrot.slane %v1010, 1
      %v1084 = vrot.slane %v1011, 1
      %v1085 = vsel %vm358, %v1083, %v1084
      %v1086 = vrot.slane %v1012, 1
      %v1087 = vrot.slane %v1013, 1
      %v1088 = vsel %vm358, %v1086, %v1087
      %v1089 = vrot.slane %v1014, 1
      %v1090 = vrot.slane %v1015, 1
      %v1091 = vsel %vm358, %v1089, %v1090
      %v1092 = vrot.slane %v1016, 1
      %v1093 = vrot.slane %v1017, 1
      %v1094 = vsel %vm358, %v1092, %v1093
      %v1095 = vrot.slane %v962, 1
      %v1096 = vrot.slane %v963, 1
      %v1097 = vsel %vm358, %v1095, %v1096
      %v1130 = vsel %vm358, %v1051, -inf
      %v1131 = vsel %vm358, %v1054, -inf
      %v1132 = vsel %vm358, %v1057, -inf
      %v1133 = vsel %vm358, %v1060, -inf
      %v1134 = vsel %vm358, %v1063, -inf
      %v1135 = vsel %vm358, %v1066, -inf
      %v1136 = vsel %vm358, %v1069, -inf
      %v1137 = vsel %vm358, %v1072, -inf
      %v1138 = vsel %vm358, %v1075, -inf
      %v1139 = vsel %vm358, %v1078, -inf
      %v1140 = vsel %vm358, %v1081, -inf
      %v1141 = vsel %vm358, %v1084, -inf
      %v1142 = vsel %vm358, %v1087, -inf
      %v1143 = vsel %vm358, %v1090, -inf
      %v1144 = vsel %vm358, %v1093, -inf
      %v1145 = vsel %vm358, %v1096, -inf
      %v1146 = vmax.f32 %v964, %v1052
      %v1147 = vmax.f32 %v965, %v1130
      %v1148 = vmax.f32 %v966, %v1055
      %v1149 = vmax.f32 %v967, %v1131
      %v1150 = vmax.f32 %v992, %v1058
      %v1151 = vmax.f32 %v993, %v1132
      %v1152 = vmax.f32 %v994, %v1061
      %v1153 = vmax.f32 %v995, %v1133
      %v1154 = vmax.f32 %v996, %v1064
      %v1155 = vmax.f32 %v997, %v1134
      %v1156 = vmax.f32 %v998, %v1067
      %v1157 = vmax.f32 %v999, %v1135
      %v1158 = vmax.f32 %v1000, %v1070
      %v1159 = vmax.f32 %v1001, %v1136
      %v1160 = vmax.f32 %v1002, %v1073
      %v1161 = vmax.f32 %v1003, %v1137
      %v1162 = vmax.f32 %v1004, %v1076
      %v1163 = vmax.f32 %v1005, %v1138
      %v1164 = vmax.f32 %v1006, %v1079
      %v1165 = vmax.f32 %v1007, %v1139
      %v1166 = vmax.f32 %v1008, %v1082
      %v1167 = vmax.f32 %v1009, %v1140
      %v1168 = vmax.f32 %v1010, %v1085
      %v1169 = vmax.f32 %v1011, %v1141
      %v1170 = vmax.f32 %v1012, %v1088
      %v1171 = vmax.f32 %v1013, %v1142
      %v1172 = vmax.f32 %v1014, %v1091
      %v1173 = vmax.f32 %v1015, %v1143
      %v1174 = vmax.f32 %v1016, %v1094
      %v1175 = vmax.f32 %v1017, %v1144
      %v1176 = vmax.f32 %v962, %v1097
      %v1177 = vmax.f32 %v963, %v1145
      %v1178 = vrot.slane %v964, 7
      %v1179 = vrot.slane %v965, 7
      %v1180 = vsel %vm487, %v1178, %v1179
      %v1181 = vrot.slane %v966, 7
      %v1182 = vrot.slane %v967, 7
      %v1183 = vsel %vm487, %v1181, %v1182
      %v1184 = vrot.slane %v992, 7
      %v1185 = vrot.slane %v993, 7
      %v1186 = vsel %vm487, %v1184, %v1185
      %v1187 = vrot.slane %v994, 7
      %v1188 = vrot.slane %v995, 7
      %v1189 = vsel %vm487, %v1187, %v1188
      %v1190 = vrot.slane %v996, 7
      %v1191 = vrot.slane %v997, 7
      %v1192 = vsel %vm487, %v1190, %v1191
      %v1193 = vrot.slane %v998, 7
      %v1194 = vrot.slane %v999, 7
      %v1195 = vsel %vm487, %v1193, %v1194
      %v1196 = vrot.slane %v1000, 7
      %v1197 = vrot.slane %v1001, 7
      %v1198 = vsel %vm487, %v1196, %v1197
      %v1199 = vrot.slane %v1002, 7
      %v1200 = vrot.slane %v1003, 7
      %v1201 = vsel %vm487, %v1199, %v1200
      %v1202 = vrot.slane %v1004, 7
      %v1203 = vrot.slane %v1005, 7
      %v1204 = vsel %vm487, %v1202, %v1203
      %v1205 = vrot.slane %v1006, 7
      %v1206 = vrot.slane %v1007, 7
      %v1207 = vsel %vm487, %v1205, %v1206
      %v1208 = vrot.slane %v1008, 7
      %v1209 = vrot.slane %v1009, 7
      %v1210 = vsel %vm487, %v1208, %v1209
      %v1211 = vrot.slane %v1010, 7
      %v1212 = vrot.slane %v1011, 7
      %v1213 = vsel %vm487, %v1211, %v1212
      %v1214 = vrot.slane %v1012, 7
      %v1215 = vrot.slane %v1013, 7
      %v1216 = vsel %vm487, %v1214, %v1215
      %v1217 = vrot.slane %v1014, 7
      %v1218 = vrot.slane %v1015, 7
      %v1219 = vsel %vm487, %v1217, %v1218
      %v1220 = vrot.slane %v1016, 7
      %v1221 = vrot.slane %v1017, 7
      %v1222 = vsel %vm487, %v1220, %v1221
      %v1223 = vrot.slane %v962, 7
      %v1224 = vrot.slane %v963, 7
      %v1225 = vsel %vm487, %v1223, %v1224
      %v1258 = vsel %vm487, -inf, %v1178
      %v1259 = vsel %vm487, -inf, %v1181
      %v1260 = vsel %vm487, -inf, %v1184
      %v1261 = vsel %vm487, -inf, %v1187
      %v1262 = vsel %vm487, -inf, %v1190
      %v1263 = vsel %vm487, -inf, %v1193
      %v1264 = vsel %vm487, -inf, %v1196
      %v1265 = vsel %vm487, -inf, %v1199
      %v1266 = vsel %vm487, -inf, %v1202
      %v1267 = vsel %vm487, -inf, %v1205
      %v1268 = vsel %vm487, -inf, %v1208
      %v1269 = vsel %vm487, -inf, %v1211
      %v1270 = vsel %vm487, -inf, %v1214
      %v1271 = vsel %vm487, -inf, %v1217
      %v1272 = vsel %vm487, -inf, %v1220
      %v1273 = vsel %vm487, -inf, %v1223
      %v1274 = vmax.f32 %v1146, %v1258
      %v1275 = vmax.f32 %v1147, %v1180
      %v1276 = vmax.f32 %v1148, %v1259
      %v1277 = vmax.f32 %v1149, %v1183
      %v1278 = vmax.f32 %v1150, %v1260
      %v1279 = vmax.f32 %v1151, %v1186
      %v1280 = vmax.f32 %v1152, %v1261
      %v1281 = vmax.f32 %v1153, %v1189
      %v1282 = vmax.f32 %v1154, %v1262
      %v1283 = vmax.f32 %v1155, %v1192
      %v1284 = vmax.f32 %v1156, %v1263
      %v1285 = vmax.f32 %v1157, %v1195
      %v1286 = vmax.f32 %v1158, %v1264
      %v1287 = vmax.f32 %v1159, %v1198
      %v1288 = vmax.f32 %v1160, %v1265
      %v1289 = vmax.f32 %v1161, %v1201
      %v1290 = vmax.f32 %v1162, %v1266
      %v1291 = vmax.f32 %v1163, %v1204
      %v1292 = vmax.f32 %v1164, %v1267
      %v1293 = vmax.f32 %v1165, %v1207
      %v1294 = vmax.f32 %v1166, %v1268
      %v1295 = vmax.f32 %v1167, %v1210
      %v1296 = vmax.f32 %v1168, %v1269
      %v1297 = vmax.f32 %v1169, %v1213
      %v1298 = vmax.f32 %v1170, %v1270
      %v1299 = vmax.f32 %v1171, %v1216
      %v1300 = vmax.f32 %v1172, %v1271
      %v1301 = vmax.f32 %v1173, %v1219
      %v1302 = vmax.f32 %v1174, %v1272
      %v1303 = vmax.f32 %v1175, %v1222
      %v1304 = vmax.f32 %v1176, %v1273
      %v1305 = vmax.f32 %v1177, %v1225
      %v1306 = vrot.slane %v964, 2
      %v1307 = vrot.slane %v965, 2
      %v1308 = vsel %vm616, %v1306, %v1307
      %v1309 = vrot.slane %v966, 2
      %v1310 = vrot.slane %v967, 2
      %v1311 = vsel %vm616, %v1309, %v1310
      %v1312 = vrot.slane %v992, 2
      %v1313 = vrot.slane %v993, 2
      %v1314 = vsel %vm616, %v1312, %v1313
      %v1315 = vrot.slane %v994, 2
      %v1316 = vrot.slane %v995, 2
      %v1317 = vsel %vm616, %v1315, %v1316
      %v1318 = vrot.slane %v996, 2
      %v1319 = vrot.slane %v997, 2
      %v1320 = vsel %vm616, %v1318, %v1319
      %v1321 = vrot.slane %v998, 2
      %v1322 = vrot.slane %v999, 2
      %v1323 = vsel %vm616, %v1321, %v1322
      %v1324 = vrot.slane %v1000, 2
      %v1325 = vrot.slane %v1001, 2
      %v1326 = vsel %vm616, %v1324, %v1325
      %v1327 = vrot.slane %v1002, 2
      %v1328 = vrot.slane %v1003, 2
      %v1329 = vsel %vm616, %v1327, %v1328
      %v1330 = vrot.slane %v1004, 2
      %v1331 = vrot.slane %v1005, 2
      %v1332 = vsel %vm616, %v1330, %v1331
      %v1333 = vrot.slane %v1006, 2
      %v1334 = vrot.slane %v1007, 2
      %v1335 = vsel %vm616, %v1333, %v1334
      %v1336 = vrot.slane %v1008, 2
      %v1337 = vrot.slane %v1009, 2
      %v1338 = vsel %vm616, %v1336, %v1337
      %v1339 = vrot.slane %v1010, 2
      %v1340 = vrot.slane %v1011, 2
      %v1341 = vsel %vm616, %v1339, %v1340
      %v1342 = vrot.slane %v1012, 2
      %v1343 = vrot.slane %v1013, 2
      %v1344 = vsel %vm616, %v1342, %v1343
      %v1345 = vrot.slane %v1014, 2
      %v1346 = vrot.slane %v1015, 2
      %v1347 = vsel %vm616, %v1345, %v1346
      %v1348 = vrot.slane %v1016, 2
      %v1349 = vrot.slane %v1017, 2
      %v1350 = vsel %vm616, %v1348, %v1349
      %v1351 = vrot.slane %v962, 2
      %v1352 = vrot.slane %v963, 2
      %v1353 = vsel %vm616, %v1351, %v1352
      %v1386 = vsel %vm616, %v1307, -inf
      %v1387 = vsel %vm616, %v1310, -inf
      %v1388 = vsel %vm616, %v1313, -inf
      %v1389 = vsel %vm616, %v1316, -inf
      %v1390 = vsel %vm616, %v1319, -inf
      %v1391 = vsel %vm616, %v1322, -inf
      %v1392 = vsel %vm616, %v1325, -inf
      %v1393 = vsel %vm616, %v1328, -inf
      %v1394 = vsel %vm616, %v1331, -inf
      %v1395 = vsel %vm616, %v1334, -inf
      %v1396 = vsel %vm616, %v1337, -inf
      %v1397 = vsel %vm616, %v1340, -inf
      %v1398 = vsel %vm616, %v1343, -inf
      %v1399 = vsel %vm616, %v1346, -inf
      %v1400 = vsel %vm616, %v1349, -inf
      %v1401 = vsel %vm616, %v1352, -inf
      %v1402 = vmax.f32 %v1274, %v1308
      %v1403 = vmax.f32 %v1275, %v1386
      %v1404 = vmax.f32 %v1276, %v1311
      %v1405 = vmax.f32 %v1277, %v1387
      %v1406 = vmax.f32 %v1278, %v1314
      %v1407 = vmax.f32 %v1279, %v1388
      %v1408 = vmax.f32 %v1280, %v1317
      %v1409 = vmax.f32 %v1281, %v1389
      %v1410 = vmax.f32 %v1282, %v1320
      %v1411 = vmax.f32 %v1283, %v1390
      %v1412 = vmax.f32 %v1284, %v1323
      %v1413 = vmax.f32 %v1285, %v1391
      %v1414 = vmax.f32 %v1286, %v1326
      %v1415 = vmax.f32 %v1287, %v1392
      %v1416 = vmax.f32 %v1288, %v1329
      %v1417 = vmax.f32 %v1289, %v1393
      %v1418 = vmax.f32 %v1290, %v1332
      %v1419 = vmax.f32 %v1291, %v1394
      %v1420 = vmax.f32 %v1292, %v1335
      %v1421 = vmax.f32 %v1293, %v1395
      %v1422 = vmax.f32 %v1294, %v1338
      %v1423 = vmax.f32 %v1295, %v1396
      %v1424 = vmax.f32 %v1296, %v1341
      %v1425 = vmax.f32 %v1297, %v1397
      %v1426 = vmax.f32 %v1298, %v1344
      %v1427 = vmax.f32 %v1299, %v1398
      %v1428 = vmax.f32 %v1300, %v1347
      %v1429 = vmax.f32 %v1301, %v1399
      %v1430 = vmax.f32 %v1302, %v1350
      %v1431 = vmax.f32 %v1303, %v1400
      %v1432 = vmax.f32 %v1304, %v1353
      %v1433 = vmax.f32 %v1305, %v1401
      %v1434 = vrot.slane %v964, 6
      %v1435 = vrot.slane %v965, 6
      %v1436 = vsel %vm745, %v1434, %v1435
      %v1437 = vrot.slane %v966, 6
      %v1438 = vrot.slane %v967, 6
      %v1439 = vsel %vm745, %v1437, %v1438
      %v1440 = vrot.slane %v992, 6
      %v1441 = vrot.slane %v993, 6
      %v1442 = vsel %vm745, %v1440, %v1441
      %v1443 = vrot.slane %v994, 6
      %v1444 = vrot.slane %v995, 6
      %v1445 = vsel %vm745, %v1443, %v1444
      %v1446 = vrot.slane %v996, 6
      %v1447 = vrot.slane %v997, 6
      %v1448 = vsel %vm745, %v1446, %v1447
      %v1449 = vrot.slane %v998, 6
      %v1450 = vrot.slane %v999, 6
      %v1451 = vsel %vm745, %v1449, %v1450
      %v1452 = vrot.slane %v1000, 6
      %v1453 = vrot.slane %v1001, 6
      %v1454 = vsel %vm745, %v1452, %v1453
      %v1455 = vrot.slane %v1002, 6
      %v1456 = vrot.slane %v1003, 6
      %v1457 = vsel %vm745, %v1455, %v1456
      %v1458 = vrot.slane %v1004, 6
      %v1459 = vrot.slane %v1005, 6
      %v1460 = vsel %vm745, %v1458, %v1459
      %v1461 = vrot.slane %v1006, 6
      %v1462 = vrot.slane %v1007, 6
      %v1463 = vsel %vm745, %v1461, %v1462
      %v1464 = vrot.slane %v1008, 6
      %v1465 = vrot.slane %v1009, 6
      %v1466 = vsel %vm745, %v1464, %v1465
      %v1467 = vrot.slane %v1010, 6
      %v1468 = vrot.slane %v1011, 6
      %v1469 = vsel %vm745, %v1467, %v1468
      %v1470 = vrot.slane %v1012, 6
      %v1471 = vrot.slane %v1013, 6
      %v1472 = vsel %vm745, %v1470, %v1471
      %v1473 = vrot.slane %v1014, 6
      %v1474 = vrot.slane %v1015, 6
      %v1475 = vsel %vm745, %v1473, %v1474
      %v1476 = vrot.slane %v1016, 6
      %v1477 = vrot.slane %v1017, 6
      %v1478 = vsel %vm745, %v1476, %v1477
      %v1479 = vrot.slane %v962, 6
      %v1480 = vrot.slane %v963, 6
      %v1481 = vsel %vm745, %v1479, %v1480
      %v1514 = vsel %vm745, -inf, %v1434
      %v1515 = vsel %vm745, -inf, %v1437
      %v1516 = vsel %vm745, -inf, %v1440
      %v1517 = vsel %vm745, -inf, %v1443
      %v1518 = vsel %vm745, -inf, %v1446
      %v1519 = vsel %vm745, -inf, %v1449
      %v1520 = vsel %vm745, -inf, %v1452
      %v1521 = vsel %vm745, -inf, %v1455
      %v1522 = vsel %vm745, -inf, %v1458
      %v1523 = vsel %vm745, -inf, %v1461
      %v1524 = vsel %vm745, -inf, %v1464
      %v1525 = vsel %vm745, -inf, %v1467
      %v1526 = vsel %vm745, -inf, %v1470
      %v1527 = vsel %vm745, -inf, %v1473
      %v1528 = vsel %vm745, -inf, %v1476
      %v1529 = vsel %vm745, -inf, %v1479
      %v1530 = vmax.f32 %v1402, %v1514
      %v1531 = vmax.f32 %v1403, %v1436
      %v1532 = vmax.f32 %v1404, %v1515
      %v1533 = vmax.f32 %v1405, %v1439
      %v1534 = vmax.f32 %v1406, %v1516
      %v1535 = vmax.f32 %v1407, %v1442
      %v1536 = vmax.f32 %v1408, %v1517
      %v1537 = vmax.f32 %v1409, %v1445
      %v1538 = vmax.f32 %v1410, %v1518
      %v1539 = vmax.f32 %v1411, %v1448
      %v1540 = vmax.f32 %v1412, %v1519
      %v1541 = vmax.f32 %v1413, %v1451
      %v1542 = vmax.f32 %v1414, %v1520
      %v1543 = vmax.f32 %v1415, %v1454
      %v1544 = vmax.f32 %v1416, %v1521
      %v1545 = vmax.f32 %v1417, %v1457
      %v1546 = vmax.f32 %v1418, %v1522
      %v1547 = vmax.f32 %v1419, %v1460
      %v1548 = vmax.f32 %v1420, %v1523
      %v1549 = vmax.f32 %v1421, %v1463
      %v1550 = vmax.f32 %v1422, %v1524
      %v1551 = vmax.f32 %v1423, %v1466
      %v1552 = vmax.f32 %v1424, %v1525
      %v1553 = vmax.f32 %v1425, %v1469
      %v1554 = vmax.f32 %v1426, %v1526
      %v1555 = vmax.f32 %v1427, %v1472
      %v1556 = vmax.f32 %v1428, %v1527
      %v1557 = vmax.f32 %v1429, %v1475
      %v1558 = vmax.f32 %v1430, %v1528
      %v1559 = vmax.f32 %v1431, %v1478
      %v1560 = vmax.f32 %v1432, %v1529
      %v1561 = vmax.f32 %v1433, %v1481
      %s1562 = scalar_lea.vmem %s147, 256
      %1563 = vst.msk [vmem:[%s1562] sm:$0xff] %vm181, %v1530
      %1564 = vst.msk [vmem:[%s1562 + $0x8] sm:$0xff] %vm181, %v1531
      %1565 = vst.msk [vmem:[%s1562 + $0x10] sm:$0xff] %vm181, %v1532
      %1566 = vst.msk [vmem:[%s1562 + $0x18] sm:$0xff] %vm181, %v1533
      %1567 = vst.msk [vmem:[%s1562 + $0x20] sm:$0xff] %vm181, %v1534
      %1568 = vst.msk [vmem:[%s1562 + $0x28] sm:$0xff] %vm181, %v1535
      %1569 = vst.msk [vmem:[%s1562 + $0x30] sm:$0xff] %vm181, %v1536
      %1570 = vst.msk [vmem:[%s1562 + $0x38] sm:$0xff] %vm181, %v1537
      %1571 = vst.msk [vmem:[%s1562 + $0x40] sm:$0xff] %vm181, %v1538
      %1572 = vst.msk [vmem:[%s1562 + $0x48] sm:$0xff] %vm181, %v1539
      %1573 = vst.msk [vmem:[%s1562 + $0x50] sm:$0xff] %vm181, %v1540
      %1574 = vst.msk [vmem:[%s1562 + $0x58] sm:$0xff] %vm181, %v1541
      %1575 = vst.msk [vmem:[%s1562 + $0x60] sm:$0xff] %vm181, %v1542
      %1576 = vst.msk [vmem:[%s1562 + $0x68] sm:$0xff] %vm181, %v1543
      %1577 = vst.msk [vmem:[%s1562 + $0x70] sm:$0xff] %vm181, %v1544
      %1578 = vst.msk [vmem:[%s1562 + $0x78] sm:$0xff] %vm181, %v1545
      %1579 = vst.msk [vmem:[%s1562 + $0x80] sm:$0xff] %vm181, %v1546
      %1580 = vst.msk [vmem:[%s1562 + $0x88] sm:$0xff] %vm181, %v1547
      %1581 = vst.msk [vmem:[%s1562 + $0x90] sm:$0xff] %vm181, %v1548
      %1582 = vst.msk [vmem:[%s1562 + $0x98] sm:$0xff] %vm181, %v1549
      %1583 = vst.msk [vmem:[%s1562 + $0xa0] sm:$0xff] %vm181, %v1550
      %1584 = vst.msk [vmem:[%s1562 + $0xa8] sm:$0xff] %vm181, %v1551
      %1585 = vst.msk [vmem:[%s1562 + $0xb0] sm:$0xff] %vm181, %v1552
      %1586 = vst.msk [vmem:[%s1562 + $0xb8] sm:$0xff] %vm181, %v1553
      %1587 = vst.msk [vmem:[%s1562 + $0xc0] sm:$0xff] %vm181, %v1554
      %1588 = vst.msk [vmem:[%s1562 + $0xc8] sm:$0xff] %vm181, %v1555
      %1589 = vst.msk [vmem:[%s1562 + $0xd0] sm:$0xff] %vm181, %v1556
      %1590 = vst.msk [vmem:[%s1562 + $0xd8] sm:$0xff] %vm181, %v1557
      %1591 = vst.msk [vmem:[%s1562 + $0xe0] sm:$0xff] %vm181, %v1558
      %1592 = vst.msk [vmem:[%s1562 + $0xe8] sm:$0xff] %vm181, %v1559
      %1593 = vst.msk [vmem:[%s1562 + $0xf0] sm:$0xff] %vm181, %v1560
      %1594 = vst.msk [vmem:[%s1562 + $0xf8] sm:$0xff] %vm181, %v1561
      %v1595 = vmax.f32 %v1530, %v1532
      %v1596 = vmax.f32 %v1531, %v1533
      %v1597 = vmax.f32 %v1532, %v1534
      %v1598 = vmax.f32 %v1533, %v1535
      %v1599 = vmax.f32 %v1534, %v1536
      %v1600 = vmax.f32 %v1535, %v1537
      %v1601 = vmax.f32 %v1536, %v1538
      %v1602 = vmax.f32 %v1537, %v1539
      %v1603 = vmax.f32 %v1538, %v1540
      %v1604 = vmax.f32 %v1539, %v1541
      %v1605 = vmax.f32 %v1540, %v1542
      %v1606 = vmax.f32 %v1541, %v1543
      %v1607 = vmax.f32 %v1542, %v1544
      %v1608 = vmax.f32 %v1543, %v1545
      %v1609 = vmax.f32 %v1544, %v1546
      %v1610 = vmax.f32 %v1545, %v1547
      %v1611 = vmax.f32 %v1546, %v1548
      %v1612 = vmax.f32 %v1547, %v1549
      %v1613 = vmax.f32 %v1548, %v1550
      %v1614 = vmax.f32 %v1549, %v1551
      %v1615 = vmax.f32 %v1550, %v1552
      %v1616 = vmax.f32 %v1551, %v1553
      %v1617 = vmax.f32 %v1552, %v1554
      %v1618 = vmax.f32 %v1553, %v1555
      %v1619 = vmax.f32 %v1554, %v1556
      %v1620 = vmax.f32 %v1555, %v1557
      %v1621 = vmax.f32 %v1556, %v1558
      %v1622 = vmax.f32 %v1557, %v1559
      %v1623 = vmax.f32 %v1558, %v1560
      %v1624 = vmax.f32 %v1559, %v1561
      %v1625 = vmax.f32 %v1597, %v1530
      %v1626 = vmax.f32 %v1598, %v1531
      %v1627 = vmax.f32 %v1599, %v1532
      %v1628 = vmax.f32 %v1600, %v1533
      %v1629 = vmax.f32 %v1601, %v1534
      %v1630 = vmax.f32 %v1602, %v1535
      %v1631 = vmax.f32 %v1603, %v1536
      %v1632 = vmax.f32 %v1604, %v1537
      %v1633 = vmax.f32 %v1605, %v1538
      %v1634 = vmax.f32 %v1606, %v1539
      %v1635 = vmax.f32 %v1607, %v1540
      %v1636 = vmax.f32 %v1608, %v1541
      %v1637 = vmax.f32 %v1609, %v1542
      %v1638 = vmax.f32 %v1610, %v1543
      %v1639 = vmax.f32 %v1611, %v1544
      %v1640 = vmax.f32 %v1612, %v1545
      %v1641 = vmax.f32 %v1613, %v1546
      %v1642 = vmax.f32 %v1614, %v1547
      %v1643 = vmax.f32 %v1615, %v1548
      %v1644 = vmax.f32 %v1616, %v1549
      %v1645 = vmax.f32 %v1617, %v1550
      %v1646 = vmax.f32 %v1618, %v1551
      %v1647 = vmax.f32 %v1619, %v1552
      %v1648 = vmax.f32 %v1620, %v1553
      %v1649 = vmax.f32 %v1621, %v1554
      %v1650 = vmax.f32 %v1622, %v1555
      %v1651 = vmax.f32 %v1623, %v1556
      %v1652 = vmax.f32 %v1624, %v1557
      %v1653 = vmax.f32 %v1595, %v1534
      %v1654 = vmax.f32 %v1596, %v1535
      %v1655 = vmax.f32 %v1625, %v1536
      %v1656 = vmax.f32 %v1626, %v1537
      %v1657 = vmax.f32 %v1627, %v1538
      %v1658 = vmax.f32 %v1628, %v1539
      %v1659 = vmax.f32 %v1629, %v1540
      %v1660 = vmax.f32 %v1630, %v1541
      %v1661 = vmax.f32 %v1631, %v1542
      %v1662 = vmax.f32 %v1632, %v1543
      %v1663 = vmax.f32 %v1633, %v1544
      %v1664 = vmax.f32 %v1634, %v1545
      %v1665 = vmax.f32 %v1635, %v1546
      %v1666 = vmax.f32 %v1636, %v1547
      %v1667 = vmax.f32 %v1637, %v1548
      %v1668 = vmax.f32 %v1638, %v1549
      %v1669 = vmax.f32 %v1639, %v1550
      %v1670 = vmax.f32 %v1640, %v1551
      %v1671 = vmax.f32 %v1641, %v1552
      %v1672 = vmax.f32 %v1642, %v1553
      %v1673 = vmax.f32 %v1643, %v1554
      %v1674 = vmax.f32 %v1644, %v1555
      %v1675 = vmax.f32 %v1645, %v1556
      %v1676 = vmax.f32 %v1646, %v1557
      %v1677 = vmax.f32 %v1647, %v1558
      %v1678 = vmax.f32 %v1648, %v1559
      %v1679 = vmax.f32 %v1649, %v1560
      %v1680 = vmax.f32 %v1650, %v1561
      %v1681 = vmax.f32 %v1657, %v1530
      %v1682 = vmax.f32 %v1658, %v1531
      %v1683 = vmax.f32 %v1659, %v1532
      %v1684 = vmax.f32 %v1660, %v1533
      %v1685 = vmax.f32 %v1661, %v1534
      %v1686 = vmax.f32 %v1662, %v1535
      %v1687 = vmax.f32 %v1663, %v1536
      %v1688 = vmax.f32 %v1664, %v1537
      %v1689 = vmax.f32 %v1665, %v1538
      %v1690 = vmax.f32 %v1666, %v1539
      %v1691 = vmax.f32 %v1667, %v1540
      %v1692 = vmax.f32 %v1668, %v1541
      %v1693 = vmax.f32 %v1669, %v1542
      %v1694 = vmax.f32 %v1670, %v1543
      %v1695 = vmax.f32 %v1671, %v1544
      %v1696 = vmax.f32 %v1672, %v1545
      %v1697 = vmax.f32 %v1673, %v1546
      %v1698 = vmax.f32 %v1674, %v1547
      %v1699 = vmax.f32 %v1675, %v1548
      %v1700 = vmax.f32 %v1676, %v1549
      %v1701 = vmax.f32 %v1677, %v1550
      %v1702 = vmax.f32 %v1678, %v1551
      %v1703 = vmax.f32 %v1679, %v1552
      %v1704 = vmax.f32 %v1680, %v1553
      %v1705 = vmax.f32 %v1651, %v1554
      %v1706 = vmax.f32 %v1652, %v1555
      %v1739 = vrot.slane %v1653, 1
      %v1740 = vrot.slane %v1654, 1
      %v1741 = vsel %vm358, %v1739, %v1740
      %v1742 = vrot.slane %v1655, 1
      %v1743 = vrot.slane %v1656, 1
      %v1744 = vsel %vm358, %v1742, %v1743
      %v1745 = vrot.slane %v1681, 1
      %v1746 = vrot.slane %v1682, 1
      %v1747 = vsel %vm358, %v1745, %v1746
      %v1748 = vrot.slane %v1683, 1
      %v1749 = vrot.slane %v1684, 1
      %v1750 = vsel %vm358, %v1748, %v1749
      %v1751 = vrot.slane %v1685, 1
      %v1752 = vrot.slane %v1686, 1
      %v1753 = vsel %vm358, %v1751, %v1752
      %v1754 = vrot.slane %v1687, 1
      %v1755 = vrot.slane %v1688, 1
      %v1756 = vsel %vm358, %v1754, %v1755
      %v1757 = vrot.slane %v1689, 1
      %v1758 = vrot.slane %v1690, 1
      %v1759 = vsel %vm358, %v1757, %v1758
      %v1760 = vrot.slane %v1691, 1
      %v1761 = vrot.slane %v1692, 1
      %v1762 = vsel %vm358, %v1760, %v1761
      %v1763 = vrot.slane %v1693, 1
      %v1764 = vrot.slane %v1694, 1
      %v1765 = vsel %vm358, %v1763, %v1764
      %v1766 = vrot.slane %v1695, 1
      %v1767 = vrot.slane %v1696, 1
      %v1768 = vsel %vm358, %v1766, %v1767
      %v1769 = vrot.slane %v1697, 1
      %v1770 = vrot.slane %v1698, 1
      %v1771 = vsel %vm358, %v1769, %v1770
      %v1772 = vrot.slane %v1699, 1
      %v1773 = vrot.slane %v1700, 1
      %v1774 = vsel %vm358, %v1772, %v1773
      %v1775 = vrot.slane %v1701, 1
      %v1776 = vrot.slane %v1702, 1
      %v1777 = vsel %vm358, %v1775, %v1776
      %v1778 = vrot.slane %v1703, 1
      %v1779 = vrot.slane %v1704, 1
      %v1780 = vsel %vm358, %v1778, %v1779
      %v1781 = vrot.slane %v1705, 1
      %v1782 = vrot.slane %v1706, 1
      %v1783 = vsel %vm358, %v1781, %v1782
      %v1784 = vrot.slane %v1651, 1
      %v1785 = vrot.slane %v1652, 1
      %v1786 = vsel %vm358, %v1784, %v1785
      %v1819 = vsel %vm358, %v1740, -inf
      %v1820 = vsel %vm358, %v1743, -inf
      %v1821 = vsel %vm358, %v1746, -inf
      %v1822 = vsel %vm358, %v1749, -inf
      %v1823 = vsel %vm358, %v1752, -inf
      %v1824 = vsel %vm358, %v1755, -inf
      %v1825 = vsel %vm358, %v1758, -inf
      %v1826 = vsel %vm358, %v1761, -inf
      %v1827 = vsel %vm358, %v1764, -inf
      %v1828 = vsel %vm358, %v1767, -inf
      %v1829 = vsel %vm358, %v1770, -inf
      %v1830 = vsel %vm358, %v1773, -inf
      %v1831 = vsel %vm358, %v1776, -inf
      %v1832 = vsel %vm358, %v1779, -inf
      %v1833 = vsel %vm358, %v1782, -inf
      %v1834 = vsel %vm358, %v1785, -inf
      %v1835 = vmax.f32 %v1653, %v1741
      %v1836 = vmax.f32 %v1654, %v1819
      %v1837 = vmax.f32 %v1655, %v1744
      %v1838 = vmax.f32 %v1656, %v1820
      %v1839 = vmax.f32 %v1681, %v1747
      %v1840 = vmax.f32 %v1682, %v1821
      %v1841 = vmax.f32 %v1683, %v1750
      %v1842 = vmax.f32 %v1684, %v1822
      %v1843 = vmax.f32 %v1685, %v1753
      %v1844 = vmax.f32 %v1686, %v1823
      %v1845 = vmax.f32 %v1687, %v1756
      %v1846 = vmax.f32 %v1688, %v1824
      %v1847 = vmax.f32 %v1689, %v1759
      %v1848 = vmax.f32 %v1690, %v1825
      %v1849 = vmax.f32 %v1691, %v1762
      %v1850 = vmax.f32 %v1692, %v1826
      %v1851 = vmax.f32 %v1693, %v1765
      %v1852 = vmax.f32 %v1694, %v1827
      %v1853 = vmax.f32 %v1695, %v1768
      %v1854 = vmax.f32 %v1696, %v1828
      %v1855 = vmax.f32 %v1697, %v1771
      %v1856 = vmax.f32 %v1698, %v1829
      %v1857 = vmax.f32 %v1699, %v1774
      %v1858 = vmax.f32 %v1700, %v1830
      %v1859 = vmax.f32 %v1701, %v1777
      %v1860 = vmax.f32 %v1702, %v1831
      %v1861 = vmax.f32 %v1703, %v1780
      %v1862 = vmax.f32 %v1704, %v1832
      %v1863 = vmax.f32 %v1705, %v1783
      %v1864 = vmax.f32 %v1706, %v1833
      %v1865 = vmax.f32 %v1651, %v1786
      %v1866 = vmax.f32 %v1652, %v1834
      %v1867 = vrot.slane %v1653, 7
      %v1868 = vrot.slane %v1654, 7
      %v1869 = vsel %vm487, %v1867, %v1868
      %v1870 = vrot.slane %v1655, 7
      %v1871 = vrot.slane %v1656, 7
      %v1872 = vsel %vm487, %v1870, %v1871
      %v1873 = vrot.slane %v1681, 7
      %v1874 = vrot.slane %v1682, 7
      %v1875 = vsel %vm487, %v1873, %v1874
      %v1876 = vrot.slane %v1683, 7
      %v1877 = vrot.slane %v1684, 7
      %v1878 = vsel %vm487, %v1876, %v1877
      %v1879 = vrot.slane %v1685, 7
      %v1880 = vrot.slane %v1686, 7
      %v1881 = vsel %vm487, %v1879, %v1880
      %v1882 = vrot.slane %v1687, 7
      %v1883 = vrot.slane %v1688, 7
      %v1884 = vsel %vm487, %v1882, %v1883
      %v1885 = vrot.slane %v1689, 7
      %v1886 = vrot.slane %v1690, 7
      %v1887 = vsel %vm487, %v1885, %v1886
      %v1888 = vrot.slane %v1691, 7
      %v1889 = vrot.slane %v1692, 7
      %v1890 = vsel %vm487, %v1888, %v1889
      %v1891 = vrot.slane %v1693, 7
      %v1892 = vrot.slane %v1694, 7
      %v1893 = vsel %vm487, %v1891, %v1892
      %v1894 = vrot.slane %v1695, 7
      %v1895 = vrot.slane %v1696, 7
      %v1896 = vsel %vm487, %v1894, %v1895
      %v1897 = vrot.slane %v1697, 7
      %v1898 = vrot.slane %v1698, 7
      %v1899 = vsel %vm487, %v1897, %v1898
      %v1900 = vrot.slane %v1699, 7
      %v1901 = vrot.slane %v1700, 7
      %v1902 = vsel %vm487, %v1900, %v1901
      %v1903 = vrot.slane %v1701, 7
      %v1904 = vrot.slane %v1702, 7
      %v1905 = vsel %vm487, %v1903, %v1904
      %v1906 = vrot.slane %v1703, 7
      %v1907 = vrot.slane %v1704, 7
      %v1908 = vsel %vm487, %v1906, %v1907
      %v1909 = vrot.slane %v1705, 7
      %v1910 = vrot.slane %v1706, 7
      %v1911 = vsel %vm487, %v1909, %v1910
      %v1912 = vrot.slane %v1651, 7
      %v1913 = vrot.slane %v1652, 7
      %v1914 = vsel %vm487, %v1912, %v1913
      %v1947 = vsel %vm487, -inf, %v1867
      %v1948 = vsel %vm487, -inf, %v1870
      %v1949 = vsel %vm487, -inf, %v1873
      %v1950 = vsel %vm487, -inf, %v1876
      %v1951 = vsel %vm487, -inf, %v1879
      %v1952 = vsel %vm487, -inf, %v1882
      %v1953 = vsel %vm487, -inf, %v1885
      %v1954 = vsel %vm487, -inf, %v1888
      %v1955 = vsel %vm487, -inf, %v1891
      %v1956 = vsel %vm487, -inf, %v1894
      %v1957 = vsel %vm487, -inf, %v1897
      %v1958 = vsel %vm487, -inf, %v1900
      %v1959 = vsel %vm487, -inf, %v1903
      %v1960 = vsel %vm487, -inf, %v1906
      %v1961 = vsel %vm487, -inf, %v1909
      %v1962 = vsel %vm487, -inf, %v1912
      %v1963 = vmax.f32 %v1835, %v1947
      %v1964 = vmax.f32 %v1836, %v1869
      %v1965 = vmax.f32 %v1837, %v1948
      %v1966 = vmax.f32 %v1838, %v1872
      %v1967 = vmax.f32 %v1839, %v1949
      %v1968 = vmax.f32 %v1840, %v1875
      %v1969 = vmax.f32 %v1841, %v1950
      %v1970 = vmax.f32 %v1842, %v1878
      %v1971 = vmax.f32 %v1843, %v1951
      %v1972 = vmax.f32 %v1844, %v1881
      %v1973 = vmax.f32 %v1845, %v1952
      %v1974 = vmax.f32 %v1846, %v1884
      %v1975 = vmax.f32 %v1847, %v1953
      %v1976 = vmax.f32 %v1848, %v1887
      %v1977 = vmax.f32 %v1849, %v1954
      %v1978 = vmax.f32 %v1850, %v1890
      %v1979 = vmax.f32 %v1851, %v1955
      %v1980 = vmax.f32 %v1852, %v1893
      %v1981 = vmax.f32 %v1853, %v1956
      %v1982 = vmax.f32 %v1854, %v1896
      %v1983 = vmax.f32 %v1855, %v1957
      %v1984 = vmax.f32 %v1856, %v1899
      %v1985 = vmax.f32 %v1857, %v1958
      %v1986 = vmax.f32 %v1858, %v1902
      %v1987 = vmax.f32 %v1859, %v1959
      %v1988 = vmax.f32 %v1860, %v1905
      %v1989 = vmax.f32 %v1861, %v1960
      %v1990 = vmax.f32 %v1862, %v1908
      %v1991 = vmax.f32 %v1863, %v1961
      %v1992 = vmax.f32 %v1864, %v1911
      %v1993 = vmax.f32 %v1865, %v1962
      %v1994 = vmax.f32 %v1866, %v1914
      %v1995 = vrot.slane %v1653, 2
      %v1996 = vrot.slane %v1654, 2
      %v1997 = vsel %vm616, %v1995, %v1996
      %v1998 = vrot.slane %v1655, 2
      %v1999 = vrot.slane %v1656, 2
      %v2000 = vsel %vm616, %v1998, %v1999
      %v2001 = vrot.slane %v1681, 2
      %v2002 = vrot.slane %v1682, 2
      %v2003 = vsel %vm616, %v2001, %v2002
      %v2004 = vrot.slane %v1683, 2
      %v2005 = vrot.slane %v1684, 2
      %v2006 = vsel %vm616, %v2004, %v2005
      %v2007 = vrot.slane %v1685, 2
      %v2008 = vrot.slane %v1686, 2
      %v2009 = vsel %vm616, %v2007, %v2008
      %v2010 = vrot.slane %v1687, 2
      %v2011 = vrot.slane %v1688, 2
      %v2012 = vsel %vm616, %v2010, %v2011
      %v2013 = vrot.slane %v1689, 2
      %v2014 = vrot.slane %v1690, 2
      %v2015 = vsel %vm616, %v2013, %v2014
      %v2016 = vrot.slane %v1691, 2
      %v2017 = vrot.slane %v1692, 2
      %v2018 = vsel %vm616, %v2016, %v2017
      %v2019 = vrot.slane %v1693, 2
      %v2020 = vrot.slane %v1694, 2
      %v2021 = vsel %vm616, %v2019, %v2020
      %v2022 = vrot.slane %v1695, 2
      %v2023 = vrot.slane %v1696, 2
      %v2024 = vsel %vm616, %v2022, %v2023
      %v2025 = vrot.slane %v1697, 2
      %v2026 = vrot.slane %v1698, 2
      %v2027 = vsel %vm616, %v2025, %v2026
      %v2028 = vrot.slane %v1699, 2
      %v2029 = vrot.slane %v1700, 2
      %v2030 = vsel %vm616, %v2028, %v2029
      %v2031 = vrot.slane %v1701, 2
      %v2032 = vrot.slane %v1702, 2
      %v2033 = vsel %vm616, %v2031, %v2032
      %v2034 = vrot.slane %v1703, 2
      %v2035 = vrot.slane %v1704, 2
      %v2036 = vsel %vm616, %v2034, %v2035
      %v2037 = vrot.slane %v1705, 2
      %v2038 = vrot.slane %v1706, 2
      %v2039 = vsel %vm616, %v2037, %v2038
      %v2040 = vrot.slane %v1651, 2
      %v2041 = vrot.slane %v1652, 2
      %v2042 = vsel %vm616, %v2040, %v2041
      %v2075 = vsel %vm616, %v1996, -inf
      %v2076 = vsel %vm616, %v1999, -inf
      %v2077 = vsel %vm616, %v2002, -inf
      %v2078 = vsel %vm616, %v2005, -inf
      %v2079 = vsel %vm616, %v2008, -inf
      %v2080 = vsel %vm616, %v2011, -inf
      %v2081 = vsel %vm616, %v2014, -inf
      %v2082 = vsel %vm616, %v2017, -inf
      %v2083 = vsel %vm616, %v2020, -inf
      %v2084 = vsel %vm616, %v2023, -inf
      %v2085 = vsel %vm616, %v2026, -inf
      %v2086 = vsel %vm616, %v2029, -inf
      %v2087 = vsel %vm616, %v2032, -inf
      %v2088 = vsel %vm616, %v2035, -inf
      %v2089 = vsel %vm616, %v2038, -inf
      %v2090 = vsel %vm616, %v2041, -inf
      %v2091 = vmax.f32 %v1963, %v1997
      %v2092 = vmax.f32 %v1964, %v2075
      %v2093 = vmax.f32 %v1965, %v2000
      %v2094 = vmax.f32 %v1966, %v2076
      %v2095 = vmax.f32 %v1967, %v2003
      %v2096 = vmax.f32 %v1968, %v2077
      %v2097 = vmax.f32 %v1969, %v2006
      %v2098 = vmax.f32 %v1970, %v2078
      %v2099 = vmax.f32 %v1971, %v2009
      %v2100 = vmax.f32 %v1972, %v2079
      %v2101 = vmax.f32 %v1973, %v2012
      %v2102 = vmax.f32 %v1974, %v2080
      %v2103 = vmax.f32 %v1975, %v2015
      %v2104 = vmax.f32 %v1976, %v2081
      %v2105 = vmax.f32 %v1977, %v2018
      %v2106 = vmax.f32 %v1978, %v2082
      %v2107 = vmax.f32 %v1979, %v2021
      %v2108 = vmax.f32 %v1980, %v2083
      %v2109 = vmax.f32 %v1981, %v2024
      %v2110 = vmax.f32 %v1982, %v2084
      %v2111 = vmax.f32 %v1983, %v2027
      %v2112 = vmax.f32 %v1984, %v2085
      %v2113 = vmax.f32 %v1985, %v2030
      %v2114 = vmax.f32 %v1986, %v2086
      %v2115 = vmax.f32 %v1987, %v2033
      %v2116 = vmax.f32 %v1988, %v2087
      %v2117 = vmax.f32 %v1989, %v2036
      %v2118 = vmax.f32 %v1990, %v2088
      %v2119 = vmax.f32 %v1991, %v2039
      %v2120 = vmax.f32 %v1992, %v2089
      %v2121 = vmax.f32 %v1993, %v2042
      %v2122 = vmax.f32 %v1994, %v2090
      %v2123 = vrot.slane %v1653, 6
      %v2124 = vrot.slane %v1654, 6
      %v2125 = vsel %vm745, %v2123, %v2124
      %v2126 = vrot.slane %v1655, 6
      %v2127 = vrot.slane %v1656, 6
      %v2128 = vsel %vm745, %v2126, %v2127
      %v2129 = vrot.slane %v1681, 6
      %v2130 = vrot.slane %v1682, 6
      %v2131 = vsel %vm745, %v2129, %v2130
      %v2132 = vrot.slane %v1683, 6
      %v2133 = vrot.slane %v1684, 6
      %v2134 = vsel %vm745, %v2132, %v2133
      %v2135 = vrot.slane %v1685, 6
      %v2136 = vrot.slane %v1686, 6
      %v2137 = vsel %vm745, %v2135, %v2136
      %v2138 = vrot.slane %v1687, 6
      %v2139 = vrot.slane %v1688, 6
      %v2140 = vsel %vm745, %v2138, %v2139
      %v2141 = vrot.slane %v1689, 6
      %v2142 = vrot.slane %v1690, 6
      %v2143 = vsel %vm745, %v2141, %v2142
      %v2144 = vrot.slane %v1691, 6
      %v2145 = vrot.slane %v1692, 6
      %v2146 = vsel %vm745, %v2144, %v2145
      %v2147 = vrot.slane %v1693, 6
      %v2148 = vrot.slane %v1694, 6
      %v2149 = vsel %vm745, %v2147, %v2148
      %v2150 = vrot.slane %v1695, 6
      %v2151 = vrot.slane %v1696, 6
      %v2152 = vsel %vm745, %v2150, %v2151
      %v2153 = vrot.slane %v1697, 6
      %v2154 = vrot.slane %v1698, 6
      %v2155 = vsel %vm745, %v2153, %v2154
      %v2156 = vrot.slane %v1699, 6
      %v2157 = vrot.slane %v1700, 6
      %v2158 = vsel %vm745, %v2156, %v2157
      %v2159 = vrot.slane %v1701, 6
      %v2160 = vrot.slane %v1702, 6
      %v2161 = vsel %vm745, %v2159, %v2160
      %v2162 = vrot.slane %v1703, 6
      %v2163 = vrot.slane %v1704, 6
      %v2164 = vsel %vm745, %v2162, %v2163
      %v2165 = vrot.slane %v1705, 6
      %v2166 = vrot.slane %v1706, 6
      %v2167 = vsel %vm745, %v2165, %v2166
      %v2168 = vrot.slane %v1651, 6
      %v2169 = vrot.slane %v1652, 6
      %v2170 = vsel %vm745, %v2168, %v2169
      %v2203 = vsel %vm745, -inf, %v2123
      %v2204 = vsel %vm745, -inf, %v2126
      %v2205 = vsel %vm745, -inf, %v2129
      %v2206 = vsel %vm745, -inf, %v2132
      %v2207 = vsel %vm745, -inf, %v2135
      %v2208 = vsel %vm745, -inf, %v2138
      %v2209 = vsel %vm745, -inf, %v2141
      %v2210 = vsel %vm745, -inf, %v2144
      %v2211 = vsel %vm745, -inf, %v2147
      %v2212 = vsel %vm745, -inf, %v2150
      %v2213 = vsel %vm745, -inf, %v2153
      %v2214 = vsel %vm745, -inf, %v2156
      %v2215 = vsel %vm745, -inf, %v2159
      %v2216 = vsel %vm745, -inf, %v2162
      %v2217 = vsel %vm745, -inf, %v2165
      %v2218 = vsel %vm745, -inf, %v2168
      %v2219 = vmax.f32 %v2091, %v2203
      %v2220 = vmax.f32 %v2092, %v2125
      %v2221 = vmax.f32 %v2093, %v2204
      %v2222 = vmax.f32 %v2094, %v2128
      %v2223 = vmax.f32 %v2095, %v2205
      %v2224 = vmax.f32 %v2096, %v2131
      %v2225 = vmax.f32 %v2097, %v2206
      %v2226 = vmax.f32 %v2098, %v2134
      %v2227 = vmax.f32 %v2099, %v2207
      %v2228 = vmax.f32 %v2100, %v2137
      %v2229 = vmax.f32 %v2101, %v2208
      %v2230 = vmax.f32 %v2102, %v2140
      %v2231 = vmax.f32 %v2103, %v2209
      %v2232 = vmax.f32 %v2104, %v2143
      %v2233 = vmax.f32 %v2105, %v2210
      %v2234 = vmax.f32 %v2106, %v2146
      %v2235 = vmax.f32 %v2107, %v2211
      %v2236 = vmax.f32 %v2108, %v2149
      %v2237 = vmax.f32 %v2109, %v2212
      %v2238 = vmax.f32 %v2110, %v2152
      %v2239 = vmax.f32 %v2111, %v2213
      %v2240 = vmax.f32 %v2112, %v2155
      %v2241 = vmax.f32 %v2113, %v2214
      %v2242 = vmax.f32 %v2114, %v2158
      %v2243 = vmax.f32 %v2115, %v2215
      %v2244 = vmax.f32 %v2116, %v2161
      %v2245 = vmax.f32 %v2117, %v2216
      %v2246 = vmax.f32 %v2118, %v2164
      %v2247 = vmax.f32 %v2119, %v2217
      %v2248 = vmax.f32 %v2120, %v2167
      %v2249 = vmax.f32 %v2121, %v2218
      %v2250 = vmax.f32 %v2122, %v2170
      %s2251 = scalar_lea.vmem %s147, 512
      %2252 = vst.msk [vmem:[%s2251] sm:$0xff] %vm181, %v2219
      %2253 = vst.msk [vmem:[%s2251 + $0x8] sm:$0xff] %vm181, %v2220
      %2254 = vst.msk [vmem:[%s2251 + $0x10] sm:$0xff] %vm181, %v2221
      %2255 = vst.msk [vmem:[%s2251 + $0x18] sm:$0xff] %vm181, %v2222
      %2256 = vst.msk [vmem:[%s2251 + $0x20] sm:$0xff] %vm181, %v2223
      %2257 = vst.msk [vmem:[%s2251 + $0x28] sm:$0xff] %vm181, %v2224
      %2258 = vst.msk [vmem:[%s2251 + $0x30] sm:$0xff] %vm181, %v2225
      %2259 = vst.msk [vmem:[%s2251 + $0x38] sm:$0xff] %vm181, %v2226
      %2260 = vst.msk [vmem:[%s2251 + $0x40] sm:$0xff] %vm181, %v2227
      %2261 = vst.msk [vmem:[%s2251 + $0x48] sm:$0xff] %vm181, %v2228
      %2262 = vst.msk [vmem:[%s2251 + $0x50] sm:$0xff] %vm181, %v2229
      %2263 = vst.msk [vmem:[%s2251 + $0x58] sm:$0xff] %vm181, %v2230
      %2264 = vst.msk [vmem:[%s2251 + $0x60] sm:$0xff] %vm181, %v2231
      %2265 = vst.msk [vmem:[%s2251 + $0x68] sm:$0xff] %vm181, %v2232
      %2266 = vst.msk [vmem:[%s2251 + $0x70] sm:$0xff] %vm181, %v2233
      %2267 = vst.msk [vmem:[%s2251 + $0x78] sm:$0xff] %vm181, %v2234
      %2268 = vst.msk [vmem:[%s2251 + $0x80] sm:$0xff] %vm181, %v2235
      %2269 = vst.msk [vmem:[%s2251 + $0x88] sm:$0xff] %vm181, %v2236
      %2270 = vst.msk [vmem:[%s2251 + $0x90] sm:$0xff] %vm181, %v2237
      %2271 = vst.msk [vmem:[%s2251 + $0x98] sm:$0xff] %vm181, %v2238
      %2272 = vst.msk [vmem:[%s2251 + $0xa0] sm:$0xff] %vm181, %v2239
      %2273 = vst.msk [vmem:[%s2251 + $0xa8] sm:$0xff] %vm181, %v2240
      %2274 = vst.msk [vmem:[%s2251 + $0xb0] sm:$0xff] %vm181, %v2241
      %2275 = vst.msk [vmem:[%s2251 + $0xb8] sm:$0xff] %vm181, %v2242
      %2276 = vst.msk [vmem:[%s2251 + $0xc0] sm:$0xff] %vm181, %v2243
      %2277 = vst.msk [vmem:[%s2251 + $0xc8] sm:$0xff] %vm181, %v2244
      %2278 = vst.msk [vmem:[%s2251 + $0xd0] sm:$0xff] %vm181, %v2245
      %2279 = vst.msk [vmem:[%s2251 + $0xd8] sm:$0xff] %vm181, %v2246
      %2280 = vst.msk [vmem:[%s2251 + $0xe0] sm:$0xff] %vm181, %v2247
      %2281 = vst.msk [vmem:[%s2251 + $0xe8] sm:$0xff] %vm181, %v2248
      %2282 = vst.msk [vmem:[%s2251 + $0xf0] sm:$0xff] %vm181, %v2249
      %2283 = vst.msk [vmem:[%s2251 + $0xf8] sm:$0xff] %vm181, %v2250
      %p2284 = scmp.lt.s32.totalorder %s16, 1
      %s2285 = scalar_select %p2284, %s16, 1
      %p2286 = scmp.lt.s32.totalorder %s17, 0
      %s2287 = scalar_select %p2286, %s17, 0
      %s2288 = smul.addr %s2285, 128
      %s2289 = sadd.s32 %s2287, %s2288
      %s2290 = smul.addr %s2289, 8
      %s2291 = scalar_lea.vmem %s1, %s2290
      // Predicated region
      $region25: #{tpu_custom_call.1} parent=23 // pred_check
        %p2292 = pneg %p72
      $region26: #{tpu_custom_call.1} parent=23 // pred_check_branch
        %2294 = sbr.rel (%p2292) target = $region28
      $region27: #{tpu_custom_call.1} parent=23 // pred_region
        _
      $region28: #{tpu_custom_call.1} parent=23 // pred_fallthru
        _
    $region24: #{tpu_custom_call.1} parent=5 // pred_fallthru
      _
    %p2295 = scmp.le.s32.totalorder 2, %s7
    // Predicated region
    $region29: #{tpu_custom_call.1} parent=5 // pred_check
      %p2296 = pneg %p2295
    $region30: #{tpu_custom_call.1} parent=5 // pred_check_branch
      %2298 = sbr.rel (%p2296) target = $region32
    $region31: #{tpu_custom_call.1} parent=5 // pred_region
      %s2299 = ssub.s32 %s7, 2
      // Predicated region
      $region33: #{tpu_custom_call.1} parent=31 // pred_check
        %p2300 = pneg %p78
      $region34: #{tpu_custom_call.1} parent=31 // pred_check_branch
        %2302 = sbr.rel (%p2300) target = $region36
      $region35: #{tpu_custom_call.1} parent=31 // pred_region
        %p2303 = scmp.lt.s32.totalorder %s18, 1
        %s2304 = scalar_select %p2303, %s18, 1
        %p2305 = scmp.lt.s32.totalorder %s19, 0
        %s2306 = scalar_select %p2305, %s19, 0
        %s2307 = smul.addr %s2304, 128
        %s2308 = sadd.s32 %s2306, %s2307
        %s2309 = smul.addr %s2308, 8
        %s2310 = scalar_lea.vmem %s1, %s2309
      $region36: #{tpu_custom_call.1} parent=31 // pred_fallthru
        _
    $region32: #{tpu_custom_call.1} parent=5 // pred_fallthru
      _
  $region6: #{tpu_custom_call.1} parent=0 // loop_footer
    %s11 = sadd.s32 1, %s7
  $region7: #{tpu_custom_call.1} parent=0 // loop_footer_branch
    %6 = sbr.rel target = $region3
  $region8: #{tpu_custom_call.1} parent=0 // loop_exit
    _

</llo_original>
